<compile_context>
chip_gen: v7x
topology: tpu7x:2x2x1
jax: 0.10.0
libtpu: 0.0.40
codegen_flags: <defaults>
</compile_context>

<pallas_src>
import functools

import jax
import jax.numpy as jnp
from jax.experimental import pallas as pl
from jax.experimental.pallas import tpu as pltpu


def _round_up(x, m):
    return ((x + m - 1) // m) * m


def _cdiv(a, b):
    return (a + b - 1) // b


def _mlp_kernel(*refs, num_layers: int, compute_dtype):
    # refs = (x_ref, w1, b1, w2, b2, ..., wN, bN, out_ref)
    x_ref = refs[0]
    out_ref = refs[-1]
    wb = refs[1:-1]

    h = x_ref[...]                                    # (TM, in_dim), compute dtype
    for i in range(num_layers):
        w = wb[2 * i][...]                            # (in_i, out_i_pad), compute dtype
        b = wb[2 * i + 1][...]                        # (1, out_i_pad), f32
        acc = jnp.dot(h, w, preferred_element_type=jnp.float32)   # MXU, f32 acc
        acc = acc + b                                 # bias-add in f32
        if i < num_layers - 1:
            acc = jnp.maximum(acc, 0.0)               # ReLU in f32
            h = acc.astype(compute_dtype)             # narrow inter-layer act
        else:
            h = acc
    out_ref[...] = h.astype(out_ref.dtype)


def mlp_pallas(x, weights, biases, *, block_m=512, compute_dtype=jnp.bfloat16,
               lane_multiple=128):
    """Fused MLP forward.

    x:       (..., input_dim)
    weights: PyTorch-layout weights, weights[i] has shape (out_i, in_i)
    biases:  biases, biases[i] has shape (out_i,)
    compute_dtype: MXU operand dtype (default bf16). Accumulation stays f32
                   and the output keeps x.dtype.
    """
    num_layers = len(weights)
    in_dim = x.shape[-1]
    out_dim = weights[-1].shape[0]
    lead = x.shape[:-1]
    if compute_dtype is None:
        compute_dtype = x.dtype

    # Flatten all leading dims into the GEMM M dimension.
    M = 1
    for d in lead:
        M *= d
    x2 = x.reshape(M, in_dim).astype(compute_dtype)

    # ---- pad every layer's OUTPUT feature dim to a multiple of 128 ----------
    # Zero-padded columns get zero bias, stay zero through ReLU, and hit zero
    # rows of the next (pre-transposed) weight -> padding is exact.
    dims = [in_dim]                                   # per-layer (padded) widths
    wts, bss = [], []
    for w, b in zip(weights, biases):
        w = jnp.asarray(w)
        b = jnp.asarray(b)
        o, i = w.shape
        i_pad = dims[-1]                              # padded input width of layer
        o_pad = _round_up(o, lane_multiple)
        wt = jnp.zeros((i_pad, o_pad), jnp.float32).at[:i, :o].set(
            w.T.astype(jnp.float32))
        bb = jnp.zeros((1, o_pad), jnp.float32).at[0, :o].set(
            b.astype(jnp.float32))
        wts.append(wt.astype(compute_dtype))          # MXU operand dtype
        bss.append(bb)                                # bias stays f32
        dims.append(o_pad)
    out_pad = dims[-1]

    # ---- row-tile (tm) + VMEM budget, derived per chip generation -----------
    cbytes = jnp.dtype(compute_dtype).itemsize
    obytes = jnp.dtype(x.dtype).itemsize
    w_bytes = sum(int(w.size) * cbytes for w in wts) + sum(int(b.size) * 4 for b in bss)

    try:
        vmem_cap = int(pltpu.get_tpu_info().vmem_capacity_bytes)
    except Exception:
        vmem_cap = 64 * 1024 * 1024                   # conservative (v7x per-TC)

    tm = min(block_m, _round_up(max(M, 1), 8))
    if M >= 16:                                       # keep >=2 grid steps (v7x 2 TCs)
        tm = min(tm, _round_up(_cdiv(M, 2), 8))
    tm = max(tm, 8)

    def vmem_need(tm_, wb_buffers):
        acts = 2 * tm_ * in_dim * cbytes              # double-buffered x tile
        outs = 2 * tm_ * out_pad * obytes             # double-buffered out tile
        interm = 3 * tm_ * max(dims) * 4              # f32 intermediates
        return acts + outs + wb_buffers * w_bytes + interm

    budget = int(0.70 * vmem_cap)
    while tm > 8 and vmem_need(tm, 1) > budget:
        tm = max(8, _round_up(tm // 2, 8))

    vmem_limit = max(32 << 20, min(vmem_cap * 3 // 4, 96 << 20))
    grid = (_cdiv(M, tm),)

    flops = 2 * M * sum(int(w.shape[0]) * int(w.shape[1]) for w in wts)
    bytes_accessed = int(x2.size) * cbytes + w_bytes + M * out_pad * obytes
    cost = pl.CostEstimate(flops=int(flops), transcendentals=0,
                           bytes_accessed=int(bytes_accessed))

    kernel = functools.partial(_mlp_kernel, num_layers=num_layers,
                               compute_dtype=compute_dtype)
    flat_params = [t for pair in zip(wts, bss) for t in pair]

    def build(single_buffer_weights):
        wb_mode = pl.Buffered(1) if single_buffer_weights else None
        in_specs = [pl.BlockSpec((tm, in_dim), lambda m: (m, 0))]     # activations
        for wt in wts:
            di, do = wt.shape
            in_specs.append(pl.BlockSpec((di, do), lambda m: (0, 0),
                                         pipeline_mode=wb_mode))       # weight (resident)
            in_specs.append(pl.BlockSpec((1, do), lambda m: (0, 0),
                                         pipeline_mode=wb_mode))       # bias (resident)
        out_spec = pl.BlockSpec((tm, out_pad), lambda m: (m, 0))       # lane-dense out
        return pl.pallas_call(
            kernel,
            out_shape=jax.ShapeDtypeStruct((M, out_pad), x.dtype),
            grid=grid,
            in_specs=in_specs,
            out_specs=out_spec,
            compiler_params=pltpu.CompilerParams(
                dimension_semantics=("parallel",),
                vmem_limit_bytes=int(vmem_limit),
            ),
            cost_estimate=cost,
        )

    try:
        out = build(True)(x2, *flat_params)
    except Exception:
        # This jax build rejects single-buffered (Buffered(1)) resident weights;
        # fall back to default double buffering.
        out = build(False)(x2, *flat_params)

    out = out[:, :out_dim]
    return out.reshape(*lead, out_dim)


def _reference_mlp(x, weights, biases):
    """Pure-JAX reference mirroring the PyTorch MLP.forward."""
    num_layers = len(weights)
    h = x
    for i, (w, b) in enumerate(zip(weights, biases)):
        h = jnp.einsum("...i,oi->...o", h, w) + b
        if i < num_layers - 1:
            h = jax.nn.relu(h)
    return h


def _init_mlp_params(key, input_dim, hidden_dim, output_dim, num_layers):
    hs = [hidden_dim] * (num_layers - 1)
    dims_in = [input_dim] + hs
    dims_out = hs + [output_dim]
    weights, biases = [], []
    for n, k in zip(dims_in, dims_out):
        key, kw, kb = jax.random.split(key, 3)
        bound = 1.0 / (n ** 0.5)     # PyTorch nn.Linear default init range
        weights.append(jax.random.uniform(kw, (k, n), jnp.float32, -bound, bound))
        biases.append(jax.random.uniform(kb, (k,), jnp.float32, -bound, bound))
    return weights, biases


if __name__ == "__main__":
    # Small shapes: batch=2, seq=8, input_dim=32, hidden_dim=64, output_dim=16, 3 layers.
    B, S, IN_DIM, HID_DIM, OUT_DIM, NUM_LAYERS = 2, 8, 32, 64, 16, 3

    key = jax.random.PRNGKey(0)
    k_x, k_p = jax.random.split(key)
    x = jax.random.normal(k_x, (B, S, IN_DIM), jnp.float32)
    weights, biases = _init_mlp_params(k_p, IN_DIM, HID_DIM, OUT_DIM, NUM_LAYERS)

    ref = _reference_mlp(x, weights, biases)

    # Default path: bf16 MXU operands, f32 accumulation -> loose tolerance.
    out_bf16 = jax.block_until_ready(mlp_pallas(x, weights, biases))
    assert out_bf16.shape == (B, S, OUT_DIM)
    assert jnp.allclose(out_bf16, ref, atol=5e-2, rtol=5e-2), "bf16 path mismatch"

    # Full-f32 path: strict check against the f32 reference.
    out_f32 = jax.block_until_ready(
        mlp_pallas(x, weights, biases, compute_dtype=jnp.float32))
    assert out_f32.shape == (B, S, OUT_DIM)
    assert jnp.allclose(out_f32, ref, atol=1e-4, rtol=1e-4), "f32 path mismatch"

    print("KERNEL_OK")
</pallas_src>

<mosaic_0001>
module attributes {stable_mosaic.version = 11 : i64} {
  func.func @_mlp_kernel(%arg0: i32, %arg1: memref<8x32xbf16, #tpu.memory_space<vmem>>, %arg2: memref<32x128xbf16, #tpu.memory_space<vmem>>, %arg3: memref<1x128xf32, #tpu.memory_space<vmem>>, %arg4: memref<128x128xbf16, #tpu.memory_space<vmem>>, %arg5: memref<1x128xf32, #tpu.memory_space<vmem>>, %arg6: memref<128x128xbf16, #tpu.memory_space<vmem>>, %arg7: memref<1x128xf32, #tpu.memory_space<vmem>>, %arg8: memref<8x128xf32, #tpu.memory_space<vmem>>) attributes {dimension_semantics = [#tpu.dimension_semantics<parallel>], iteration_bounds = array<i64: 2>, scalar_prefetch = 0 : i64, scratch_operands = 0 : i64, tpu.core_type = #tpu.core_type<tc>, window_params = [{transform_indices = @transform_0, window_bounds = array<i64: 8, 32>}, {pipeline_mode = #tpu.pipeline_mode<synchronous>, transform_indices = @transform_1, window_bounds = array<i64: 32, 128>}, {pipeline_mode = #tpu.pipeline_mode<synchronous>, transform_indices = @transform_2, window_bounds = array<i64: 1, 128>}, {pipeline_mode = #tpu.pipeline_mode<synchronous>, transform_indices = @transform_3, window_bounds = array<i64: 128, 128>}, {pipeline_mode = #tpu.pipeline_mode<synchronous>, transform_indices = @transform_4, window_bounds = array<i64: 1, 128>}, {pipeline_mode = #tpu.pipeline_mode<synchronous>, transform_indices = @transform_5, window_bounds = array<i64: 128, 128>}, {pipeline_mode = #tpu.pipeline_mode<synchronous>, transform_indices = @transform_6, window_bounds = array<i64: 1, 128>}, {transform_indices = @transform_7, window_bounds = array<i64: 8, 128>}]} {
    %c0 = arith.constant 0 : index
    %c0_0 = arith.constant 0 : index
    %0 = vector.load %arg1[%c0, %c0_0] : memref<8x32xbf16, #tpu.memory_space<vmem>>, vector<8x32xbf16>
    %c0_1 = arith.constant 0 : index
    %c0_2 = arith.constant 0 : index
    %1 = vector.load %arg2[%c0_1, %c0_2] : memref<32x128xbf16, #tpu.memory_space<vmem>>, vector<32x128xbf16>
    %c0_3 = arith.constant 0 : index
    %c0_4 = arith.constant 0 : index
    %2 = vector.load %arg3[%c0_3, %c0_4] : memref<1x128xf32, #tpu.memory_space<vmem>>, vector<1x128xf32>
    %cst = arith.constant dense<0.000000e+00> : vector<8x128xf32>
    %3 = tpu.matmul %0, %1, %cst {dimension_numbers = #tpu.dot_dimension_numbers<[1], [0], [0], [1], [0, 0, 1, 1], [], []>} : vector<8x32xbf16>, vector<32x128xbf16>, vector<8x128xf32> -> vector<8x128xf32>
    %4 = vector.broadcast %2 : vector<1x128xf32> to vector<8x128xf32>
    %5 = arith.addf %3, %4 : vector<8x128xf32>
    %cst_5 = arith.constant 0.000000e+00 : f32
    %6 = vector.broadcast %cst_5 : f32 to vector<8x128xf32>
    %7 = arith.maximumf %5, %6 : vector<8x128xf32>
    %8 = arith.truncf %7 : vector<8x128xf32> to vector<8x128xbf16>
    %c0_6 = arith.constant 0 : index
    %c0_7 = arith.constant 0 : index
    %9 = vector.load %arg4[%c0_6, %c0_7] : memref<128x128xbf16, #tpu.memory_space<vmem>>, vector<128x128xbf16>
    %c0_8 = arith.constant 0 : index
    %c0_9 = arith.constant 0 : index
    %10 = vector.load %arg5[%c0_8, %c0_9] : memref<1x128xf32, #tpu.memory_space<vmem>>, vector<1x128xf32>
    %cst_10 = arith.constant dense<0.000000e+00> : vector<8x128xf32>
    %11 = tpu.matmul %8, %9, %cst_10 {dimension_numbers = #tpu.dot_dimension_numbers<[1], [0], [0], [1], [0, 0, 1, 1], [], []>} : vector<8x128xbf16>, vector<128x128xbf16>, vector<8x128xf32> -> vector<8x128xf32>
    %12 = vector.broadcast %10 : vector<1x128xf32> to vector<8x128xf32>
    %13 = arith.addf %11, %12 : vector<8x128xf32>
    %cst_11 = arith.constant 0.000000e+00 : f32
    %14 = vector.broadcast %cst_11 : f32 to vector<8x128xf32>
    %15 = arith.maximumf %13, %14 : vector<8x128xf32>
    %16 = arith.truncf %15 : vector<8x128xf32> to vector<8x128xbf16>
    %c0_12 = arith.constant 0 : index
    %c0_13 = arith.constant 0 : index
    %17 = vector.load %arg6[%c0_12, %c0_13] : memref<128x128xbf16, #tpu.memory_space<vmem>>, vector<128x128xbf16>
    %c0_14 = arith.constant 0 : index
    %c0_15 = arith.constant 0 : index
    %18 = vector.load %arg7[%c0_14, %c0_15] : memref<1x128xf32, #tpu.memory_space<vmem>>, vector<1x128xf32>
    %cst_16 = arith.constant dense<0.000000e+00> : vector<8x128xf32>
    %19 = tpu.matmul %16, %17, %cst_16 {dimension_numbers = #tpu.dot_dimension_numbers<[1], [0], [0], [1], [0, 0, 1, 1], [], []>} : vector<8x128xbf16>, vector<128x128xbf16>, vector<8x128xf32> -> vector<8x128xf32>
    %20 = vector.broadcast %18 : vector<1x128xf32> to vector<8x128xf32>
    %21 = arith.addf %19, %20 : vector<8x128xf32>
    %c0_17 = arith.constant 0 : index
    %c0_18 = arith.constant 0 : index
    %22 = vector.load %arg8[%c0_17, %c0_18] : memref<8x128xf32, #tpu.memory_space<vmem>>, vector<8x128xf32>
    tpu.vector_store %arg8[%c0_17, %c0_18], %21 {strides = array<i32>} : memref<8x128xf32, #tpu.memory_space<vmem>>, vector<8x128xf32>,
    return
  }
  func.func @transform_0(%arg0: i32) -> (i32, i32) {
    %c0_i32 = arith.constant 0 : i32
    %c0_i32_0 = arith.constant 0 : i32
    return %arg0, %c0_i32 : i32, i32
  }
  func.func @transform_1(%arg0: i32) -> (i32, i32) {
    %c0_i32 = arith.constant 0 : i32
    %c0_i32_0 = arith.constant 0 : i32
    %c0_i32_1 = arith.constant 0 : i32
    return %c0_i32, %c0_i32_0 : i32, i32
  }
  func.func @transform_2(%arg0: i32) -> (i32, i32) {
    %c0_i32 = arith.constant 0 : i32
    %c0_i32_0 = arith.constant 0 : i32
    %c0_i32_1 = arith.constant 0 : i32
    return %c0_i32, %c0_i32_0 : i32, i32
  }
  func.func @transform_3(%arg0: i32) -> (i32, i32) {
    %c0_i32 = arith.constant 0 : i32
    %c0_i32_0 = arith.constant 0 : i32
    %c0_i32_1 = arith.constant 0 : i32
    return %c0_i32, %c0_i32_0 : i32, i32
  }
  func.func @transform_4(%arg0: i32) -> (i32, i32) {
    %c0_i32 = arith.constant 0 : i32
    %c0_i32_0 = arith.constant 0 : i32
    %c0_i32_1 = arith.constant 0 : i32
    return %c0_i32, %c0_i32_0 : i32, i32
  }
  func.func @transform_5(%arg0: i32) -> (i32, i32) {
    %c0_i32 = arith.constant 0 : i32
    %c0_i32_0 = arith.constant 0 : i32
    %c0_i32_1 = arith.constant 0 : i32
    return %c0_i32, %c0_i32_0 : i32, i32
  }
  func.func @transform_6(%arg0: i32) -> (i32, i32) {
    %c0_i32 = arith.constant 0 : i32
    %c0_i32_0 = arith.constant 0 : i32
    %c0_i32_1 = arith.constant 0 : i32
    return %c0_i32, %c0_i32_0 : i32, i32
  }
  func.func @transform_7(%arg0: i32) -> (i32, i32) {
    %c0_i32 = arith.constant 0 : i32
    %c0_i32_0 = arith.constant 0 : i32
    return %arg0, %c0_i32 : i32, i32
  }
}

module attributes {stable_mosaic.version = 11 : i64} {
  func.func @_mlp_kernel(%arg0: i32, %arg1: memref<8x32xbf16, #tpu.memory_space<vmem>>, %arg2: memref<32x128xbf16, #tpu.memory_space<vmem>>, %arg3: memref<1x128xf32, #tpu.memory_space<vmem>>, %arg4: memref<128x128xbf16, #tpu.memory_space<vmem>>, %arg5: memref<1x128xf32, #tpu.memory_space<vmem>>, %arg6: memref<128x128xbf16, #tpu.memory_space<vmem>>, %arg7: memref<1x128xf32, #tpu.memory_space<vmem>>, %arg8: memref<8x128xf32, #tpu.memory_space<vmem>>) attributes {dimension_semantics = [#tpu.dimension_semantics<parallel>], iteration_bounds = array<i64: 2>, scalar_prefetch = 0 : i64, scratch_operands = 0 : i64, tpu.core_type = #tpu.core_type<tc>, window_params = [{transform_indices = @transform_0, window_bounds = array<i64: 8, 32>}, {pipeline_mode = #tpu.pipeline_mode<synchronous>, transform_indices = @transform_1, window_bounds = array<i64: 32, 128>}, {pipeline_mode = #tpu.pipeline_mode<synchronous>, transform_indices = @transform_2, window_bounds = array<i64: 1, 128>}, {pipeline_mode = #tpu.pipeline_mode<synchronous>, transform_indices = @transform_3, window_bounds = array<i64: 128, 128>}, {pipeline_mode = #tpu.pipeline_mode<synchronous>, transform_indices = @transform_4, window_bounds = array<i64: 1, 128>}, {pipeline_mode = #tpu.pipeline_mode<synchronous>, transform_indices = @transform_5, window_bounds = array<i64: 128, 128>}, {pipeline_mode = #tpu.pipeline_mode<synchronous>, transform_indices = @transform_6, window_bounds = array<i64: 1, 128>}, {transform_indices = @transform_7, window_bounds = array<i64: 8, 128>}]} {
    %c0 = arith.constant 0 : index
    %c0_0 = arith.constant 0 : index
    %0 = vector.load %arg1[%c0, %c0_0] : memref<8x32xbf16, #tpu.memory_space<vmem>>, vector<8x32xbf16>
    %c0_1 = arith.constant 0 : index
    %c0_2 = arith.constant 0 : index
    %1 = vector.load %arg2[%c0_1, %c0_2] : memref<32x128xbf16, #tpu.memory_space<vmem>>, vector<32x128xbf16>
    %c0_3 = arith.constant 0 : index
    %c0_4 = arith.constant 0 : index
    %2 = vector.load %arg3[%c0_3, %c0_4] : memref<1x128xf32, #tpu.memory_space<vmem>>, vector<1x128xf32>
    %cst = arith.constant dense<0.000000e+00> : vector<8x128xf32>
    %3 = tpu.matmul %0, %1, %cst {dimension_numbers = #tpu.dot_dimension_numbers<[1], [0], [0], [1], [0, 0, 1, 1], [], []>} : vector<8x32xbf16>, vector<32x128xbf16>, vector<8x128xf32> -> vector<8x128xf32>
    %4 = vector.broadcast %2 : vector<1x128xf32> to vector<8x128xf32>
    %5 = arith.addf %3, %4 : vector<8x128xf32>
    %cst_5 = arith.constant 0.000000e+00 : f32
    %6 = vector.broadcast %cst_5 : f32 to vector<8x128xf32>
    %7 = arith.maximumf %5, %6 : vector<8x128xf32>
    %8 = arith.truncf %7 : vector<8x128xf32> to vector<8x128xbf16>
    %c0_6 = arith.constant 0 : index
    %c0_7 = arith.constant 0 : index
    %9 = vector.load %arg4[%c0_6, %c0_7] : memref<128x128xbf16, #tpu.memory_space<vmem>>, vector<128x128xbf16>
    %c0_8 = arith.constant 0 : index
    %c0_9 = arith.constant 0 : index
    %10 = vector.load %arg5[%c0_8, %c0_9] : memref<1x128xf32, #tpu.memory_space<vmem>>, vector<1x128xf32>
    %cst_10 = arith.constant dense<0.000000e+00> : vector<8x128xf32>
    %11 = tpu.matmul %8, %9, %cst_10 {dimension_numbers = #tpu.dot_dimension_numbers<[1], [0], [0], [1], [0, 0, 1, 1], [], []>} : vector<8x128xbf16>, vector<128x128xbf16>, vector<8x128xf32> -> vector<8x128xf32>
    %12 = vector.broadcast %10 : vector<1x128xf32> to vector<8x128xf32>
    %13 = arith.addf %11, %12 : vector<8x128xf32>
    %cst_11 = arith.constant 0.000000e+00 : f32
    %14 = vector.broadcast %cst_11 : f32 to vector<8x128xf32>
    %15 = arith.maximumf %13, %14 : vector<8x128xf32>
    %16 = arith.truncf %15 : vector<8x128xf32> to vector<8x128xbf16>
    %c0_12 = arith.constant 0 : index
    %c0_13 = arith.constant 0 : index
    %17 = vector.load %arg6[%c0_12, %c0_13] : memref<128x128xbf16, #tpu.memory_space<vmem>>, vector<128x128xbf16>
    %c0_14 = arith.constant 0 : index
    %c0_15 = arith.constant 0 : index
    %18 = vector.load %arg7[%c0_14, %c0_15] : memref<1x128xf32, #tpu.memory_space<vmem>>, vector<1x128xf32>
    %cst_16 = arith.constant dense<0.000000e+00> : vector<8x128xf32>
    %19 = tpu.matmul %16, %17, %cst_16 {dimension_numbers = #tpu.dot_dimension_numbers<[1], [0], [0], [1], [0, 0, 1, 1], [], []>} : vector<8x128xbf16>, vector<128x128xbf16>, vector<8x128xf32> -> vector<8x128xf32>
    %20 = vector.broadcast %18 : vector<1x128xf32> to vector<8x128xf32>
    %21 = arith.addf %19, %20 : vector<8x128xf32>
    %c0_17 = arith.constant 0 : index
    %c0_18 = arith.constant 0 : index
    %22 = vector.load %arg8[%c0_17, %c0_18] : memref<8x128xf32, #tpu.memory_space<vmem>>, vector<8x128xf32>
    tpu.vector_store %arg8[%c0_17, %c0_18], %21 {strides = array<i32>} : memref<8x128xf32, #tpu.memory_space<vmem>>, vector<8x128xf32>,
    return
  }
  func.func @transform_0(%arg0: i32) -> (i32, i32) {
    %c0_i32 = arith.constant 0 : i32
    %c0_i32_0 = arith.constant 0 : i32
    return %arg0, %c0_i32 : i32, i32
  }
  func.func @transform_1(%arg0: i32) -> (i32, i32) {
    %c0_i32 = arith.constant 0 : i32
    %c0_i32_0 = arith.constant 0 : i32
    %c0_i32_1 = arith.constant 0 : i32
    return %c0_i32, %c0_i32_0 : i32, i32
  }
  func.func @transform_2(%arg0: i32) -> (i32, i32) {
    %c0_i32 = arith.constant 0 : i32
    %c0_i32_0 = arith.constant 0 : i32
    %c0_i32_1 = arith.constant 0 : i32
    return %c0_i32, %c0_i32_0 : i32, i32
  }
  func.func @transform_3(%arg0: i32) -> (i32, i32) {
    %c0_i32 = arith.constant 0 : i32
    %c0_i32_0 = arith.constant 0 : i32
    %c0_i32_1 = arith.constant 0 : i32
    return %c0_i32, %c0_i32_0 : i32, i32
  }
  func.func @transform_4(%arg0: i32) -> (i32, i32) {
    %c0_i32 = arith.constant 0 : i32
    %c0_i32_0 = arith.constant 0 : i32
    %c0_i32_1 = arith.constant 0 : i32
    return %c0_i32, %c0_i32_0 : i32, i32
  }
  func.func @transform_5(%arg0: i32) -> (i32, i32) {
    %c0_i32 = arith.constant 0 : i32
    %c0_i32_0 = arith.constant 0 : i32
    %c0_i32_1 = arith.constant 0 : i32
    return %c0_i32, %c0_i32_0 : i32, i32
  }
  func.func @transform_6(%arg0: i32) -> (i32, i32) {
    %c0_i32 = arith.constant 0 : i32
    %c0_i32_0 = arith.constant 0 : i32
    %c0_i32_1 = arith.constant 0 : i32
    return %c0_i32, %c0_i32_0 : i32, i32
  }
  func.func @transform_7(%arg0: i32) -> (i32, i32) {
    %c0_i32 = arith.constant 0 : i32
    %c0_i32_0 = arith.constant 0 : i32
    return %arg0, %c0_i32 : i32, i32
  }
}

</mosaic_0001>

<llo_original>
// kernel: tpu_custom_call.1
$region0: #{tpu_custom_call.1}
  #allocation0 [shape = 'u32[]', space=smem, size = 0x4, offset = 0x4, fixed_abs, tag = 'smem constant byte address 0x4 - core index']
  #allocation1 [shape = 'u32[144,128]{1,0:T(1,128)}', space=vmem, size = 0x12000, scoped, tag = 'internal scratch']
  %s0 = inlined_call_operand.hbm [shape: bf16[16,32], index: 0, kind: input, shape index: {}]
  %s1 = inlined_call_operand.hbm [shape: bf16[32,128], index: 1, kind: input, shape index: {}]
  %s2 = inlined_call_operand.vmem [shape: f32[1,128], index: 2, kind: input, shape index: {}]
  %s3 = inlined_call_operand.hbm [shape: bf16[128,128], index: 3, kind: input, shape index: {}]
  %s4 = inlined_call_operand.vmem [shape: f32[1,128], index: 4, kind: input, shape index: {}]
  %s5 = inlined_call_operand.hbm [shape: bf16[128,128], index: 5, kind: input, shape index: {}]
  %s6 = inlined_call_operand.vmem [shape: f32[1,128], index: 6, kind: input, shape index: {}]
  %s7 = inlined_call_operand.hbm [shape: f32[16,128], index: 7, kind: output, shape index: {}]
  %s8 = sld [smem:[#allocation0]]
  $region77: #{tpu_custom_call.1} parent=0
    _
  %s10 = ssub.s32 1, %s8
  %s11 = scalar_select 0, %s10, %s8
  $region1: #{tpu_custom_call.1} parent=0
    #allocation2 [shape = 'u8[4096]{0}', space=vmem, size = 0x1000, scoped, tag = 'input window, operand 0']
    #allocation3 [shape = 's32[2]{0}', space=sflag, size = 0x8, scoped, tag = 'scoped memory for tpu_custom_call.1']
    #allocation4 [shape = 's32[2]{0}', space=sflag, size = 0x8, scoped, tag = 'scoped memory for tpu_custom_call.1']
    #allocation5 [shape = 'u8[8192]{0}', space=vmem, size = 0x2000, scoped, tag = 'input window, operand 1, single buffered']
    #allocation6 [shape = 's32[1]{0}', space=sflag, size = 0x4, scoped, tag = 'scoped memory for tpu_custom_call.1']
    #allocation7 [shape = 'u8[32768]{0}', space=vmem, size = 0x8000, scoped, tag = 'input window, operand 3, single buffered']
    #allocation8 [shape = 'u8[32768]{0}', space=vmem, size = 0x8000, scoped, tag = 'input window, operand 5, single buffered']
    #allocation9 [shape = 's32[1]{0}', space=sflag, size = 0x4, scoped, tag = 'scoped memory for tpu_custom_call.1']
    #allocation10 [shape = 'u8[8192]{0}', space=vmem, size = 0x2000, scoped, tag = 'output window, operand 0']
    %12 = vsyncpa [#allocation3], 0
    %s13 = scalar_lea.sflag [#allocation3], 1
    %14 = vsyncpa %s13, 0
    %15 = vsyncpa [#allocation6], 0
    %16 = vsyncpa [#allocation9], 0
    %17 = vsyncpa [#allocation4], 0
    %s18 = scalar_lea.sflag [#allocation4], 1
    %19 = vsyncpa %s18, 0
    loop: start=0, step=1, limit=4
    $region2: #{tpu_custom_call.1} parent=1 // loop_pre_header
      _
    $region3: #{tpu_custom_call.1} parent=1 // loop_header
      %s21 = sphi 0, %s25
      %p22 = scmp.ge.s32.totalorder %s21, 4
      %s31 = sphi 0, %s33
      %s34 = sphi 0, %s31
      %s35 = sphi 0, %s34
      %s51 = sphi 0, %s35
      %s55 = sphi 0, %s55
      %s57 = sphi 0, %s55
      %s58 = sphi 0, %s57
      %s72 = sphi 0, %s58
      %s76 = sphi 0, %s76
      %s78 = sphi 0, %s76
      %s79 = sphi 0, %s78
      %s93 = sphi 0, %s79
      %s97 = sphi 0, %s97
      %s99 = sphi 0, %s97
      %s100 = sphi 0, %s99
      %s114 = sphi 0, %s100
      %s118 = sphi 0, %s118
      %s120 = sphi 0, %s118
      %s121 = sphi 0, %s120
      %s135 = sphi 0, %s121
      %s139 = sphi 0, %s139
      %s141 = sphi 0, %s139
      %s142 = sphi 0, %s141
      %s156 = sphi 0, %s142
      %s160 = sphi 0, %s160
      %s162 = sphi 0, %s160
      %s163 = sphi 0, %s162
      %s177 = sphi 0, %s163
      %s183 = sphi 0, %s185
      %s186 = sphi 0, %s183
      %s187 = sphi 0, %s186
      %s203 = sphi 0, %s187
    $region4: #{tpu_custom_call.1} parent=1 // loop_header_branch
      %24 = sbr.rel (%p22) target = $region8
    $region5: #{tpu_custom_call.1} parent=1 // loop_body
      %s26 = ssub.s32 %s21, 1
      %s27 = ssub.s32 %s21, 2
      %s28 = sadd.s32 %s21, 1
      %s29 = ssub.s32 %s21, %s28
      %p30 = scmp.eq.s32.totalorder %s29, 0
      %s32 = sadd.s32 %s31, 1
      %s33 = scalar_select %p30, %s31, %s32
      %p36 = pneg %p30
      %p37 = scmp.eq.s32.totalorder %s21, 1
      %p38 = por %p36, %p37
      %p39 = scmp.ne.s32.totalorder %s31, %s34
      %p40 = scmp.eq.s32.totalorder %s21, 0
      %p41 = por %p39, %p40
      %p42 = scmp.ne.s32.totalorder %s31, %s34
      %p43 = scmp.eq.s32.totalorder %s26, 1
      %p44 = por %p42, %p43
      %p45 = scmp.ne.s32.totalorder %s34, %s35
      %p46 = scmp.eq.s32.totalorder %s26, 0
      %p47 = por %p45, %p46
      %p48 = scmp.ne.s32.totalorder %s34, %s35
      %p49 = scmp.eq.s32.totalorder %s27, 1
      %p50 = por %p48, %p49
      %p52 = scmp.ne.s32.totalorder %s35, %s51
      %p53 = scmp.eq.s32.totalorder %s27, 0
      %p54 = por %p52, %p53
      %s56 = sadd.s32 %s55, 1
      %p59 = scmp.eq.s32.totalorder %s21, 1
      %p60 = scmp.ne.s32.totalorder %s55, %s57
      %p61 = scmp.eq.s32.totalorder %s21, 0
      %p62 = por %p60, %p61
      %p63 = scmp.ne.s32.totalorder %s55, %s57
      %p64 = scmp.eq.s32.totalorder %s26, 1
      %p65 = por %p63, %p64
      %p66 = scmp.ne.s32.totalorder %s57, %s58
      %p67 = scmp.eq.s32.totalorder %s26, 0
      %p68 = por %p66, %p67
      %p69 = scmp.ne.s32.totalorder %s57, %s58
      %p70 = scmp.eq.s32.totalorder %s27, 1
      %p71 = por %p69, %p70
      %p73 = scmp.ne.s32.totalorder %s58, %s72
      %p74 = scmp.eq.s32.totalorder %s27, 0
      %p75 = por %p73, %p74
      %s77 = sadd.s32 %s76, 1
      %p80 = scmp.eq.s32.totalorder %s21, 1
      %p81 = scmp.ne.s32.totalorder %s76, %s78
      %p82 = scmp.eq.s32.totalorder %s21, 0
      %p83 = por %p81, %p82
      %p84 = scmp.ne.s32.totalorder %s76, %s78
      %p85 = scmp.eq.s32.totalorder %s26, 1
      %p86 = por %p84, %p85
      %p87 = scmp.ne.s32.totalorder %s78, %s79
      %p88 = scmp.eq.s32.totalorder %s26, 0
      %p89 = por %p87, %p88
      %p90 = scmp.ne.s32.totalorder %s78, %s79
      %p91 = scmp.eq.s32.totalorder %s27, 1
      %p92 = por %p90, %p91
      %p94 = scmp.ne.s32.totalorder %s79, %s93
      %p95 = scmp.eq.s32.totalorder %s27, 0
      %p96 = por %p94, %p95
      %s98 = sadd.s32 %s97, 1
      %p101 = scmp.eq.s32.totalorder %s21, 1
      %p102 = scmp.ne.s32.totalorder %s97, %s99
      %p103 = scmp.eq.s32.totalorder %s21, 0
      %p104 = por %p102, %p103
      %p105 = scmp.ne.s32.totalorder %s97, %s99
      %p106 = scmp.eq.s32.totalorder %s26, 1
      %p107 = por %p105, %p106
      %p108 = scmp.ne.s32.totalorder %s99, %s100
      %p109 = scmp.eq.s32.totalorder %s26, 0
      %p110 = por %p108, %p109
      %p111 = scmp.ne.s32.totalorder %s99, %s100
      %p112 = scmp.eq.s32.totalorder %s27, 1
      %p113 = por %p111, %p112
      %p115 = scmp.ne.s32.totalorder %s100, %s114
      %p116 = scmp.eq.s32.totalorder %s27, 0
      %p117 = por %p115, %p116
      %s119 = sadd.s32 %s118, 1
      %p122 = scmp.eq.s32.totalorder %s21, 1
      %p123 = scmp.ne.s32.totalorder %s118, %s120
      %p124 = scmp.eq.s32.totalorder %s21, 0
      %p125 = por %p123, %p124
      %p126 = scmp.ne.s32.totalorder %s118, %s120
      %p127 = scmp.eq.s32.totalorder %s26, 1
      %p128 = por %p126, %p127
      %p129 = scmp.ne.s32.totalorder %s120, %s121
      %p130 = scmp.eq.s32.totalorder %s26, 0
      %p131 = por %p129, %p130
      %p132 = scmp.ne.s32.totalorder %s120, %s121
      %p133 = scmp.eq.s32.totalorder %s27, 1
      %p134 = por %p132, %p133
      %p136 = scmp.ne.s32.totalorder %s121, %s135
      %p137 = scmp.eq.s32.totalorder %s27, 0
      %p138 = por %p136, %p137
      %s140 = sadd.s32 %s139, 1
      %p143 = scmp.eq.s32.totalorder %s21, 1
      %p144 = scmp.ne.s32.totalorder %s139, %s141
      %p145 = scmp.eq.s32.totalorder %s21, 0
      %p146 = por %p144, %p145
      %p147 = scmp.ne.s32.totalorder %s139, %s141
      %p148 = scmp.eq.s32.totalorder %s26, 1
      %p149 = por %p147, %p148
      %p150 = scmp.ne.s32.totalorder %s141, %s142
      %p151 = scmp.eq.s32.totalorder %s26, 0
      %p152 = por %p150, %p151
      %p153 = scmp.ne.s32.totalorder %s141, %s142
      %p154 = scmp.eq.s32.totalorder %s27, 1
      %p155 = por %p153, %p154
      %p157 = scmp.ne.s32.totalorder %s142, %s156
      %p158 = scmp.eq.s32.totalorder %s27, 0
      %p159 = por %p157, %p158
      %s161 = sadd.s32 %s160, 1
      %p164 = scmp.eq.s32.totalorder %s21, 1
      %p165 = scmp.ne.s32.totalorder %s160, %s162
      %p166 = scmp.eq.s32.totalorder %s21, 0
      %p167 = por %p165, %p166
      %p168 = scmp.ne.s32.totalorder %s160, %s162
      %p169 = scmp.eq.s32.totalorder %s26, 1
      %p170 = por %p168, %p169
      %p171 = scmp.ne.s32.totalorder %s162, %s163
      %p172 = scmp.eq.s32.totalorder %s26, 0
      %p173 = por %p171, %p172
      %p174 = scmp.ne.s32.totalorder %s162, %s163
      %p175 = scmp.eq.s32.totalorder %s27, 1
      %p176 = por %p174, %p175
      %p178 = scmp.ne.s32.totalorder %s163, %s177
      %p179 = scmp.eq.s32.totalorder %s27, 0
      %p180 = por %p178, %p179
      %s181 = ssub.s32 %s21, %s28
      %p182 = scmp.eq.s32.totalorder %s181, 0
      %s184 = sadd.s32 %s183, 1
      %s185 = scalar_select %p182, %s183, %s184
      %p188 = pneg %p182
      %p189 = scmp.eq.s32.totalorder %s21, 1
      %p190 = por %p188, %p189
      %p191 = scmp.ne.s32.totalorder %s183, %s186
      %p192 = scmp.eq.s32.totalorder %s21, 0
      %p193 = por %p191, %p192
      %p194 = scmp.ne.s32.totalorder %s183, %s186
      %p195 = scmp.eq.s32.totalorder %s26, 1
      %p196 = por %p194, %p195
      %p197 = scmp.ne.s32.totalorder %s186, %s187
      %p198 = scmp.eq.s32.totalorder %s26, 0
      %p199 = por %p197, %p198
      %p200 = scmp.ne.s32.totalorder %s186, %s187
      %p201 = scmp.eq.s32.totalorder %s27, 1
      %p202 = por %p200, %p201
      %p204 = scmp.ne.s32.totalorder %s187, %s203
      %p205 = scmp.eq.s32.totalorder %s27, 0
      %p206 = por %p204, %p205
      %p207 = scmp.le.s32.totalorder 1, %s21
      %p208 = scmp.lt.s32.totalorder %s21, 3
      %p209 = pnand %p207, %p208
      %p210 = pneg %p209
      // Predicated region
      $region9: #{tpu_custom_call.1} parent=5 // pred_check
        _
      $region10: #{tpu_custom_call.1} parent=5 // pred_check_branch
        %212 = sbr.rel (%p209) target = $region12
      $region11: #{tpu_custom_call.1} parent=5 // pred_region
        %s213 = ssub.s32 %s21, 1
        // Predicated region
        $region13: #{tpu_custom_call.1} parent=11 // pred_check
          %p214 = pneg %p68
        $region14: #{tpu_custom_call.1} parent=11 // pred_check_branch
          %216 = sbr.rel (%p214) target = $region16
        $region15: #{tpu_custom_call.1} parent=11 // pred_region
          %s218 = ssub.s32 256, 256
          %219 = vsyncadd [#allocation6], %s218
          %s220 = sshll.u32 [#allocation5], 4
          %s221 = int_to_ptr.vmem [resolvable:$true] %s220
          %226 = dma.hbm_to_vmem [thread:$0]  %s1, 256, %s221, [#allocation6], 64, 64, 4
        $region16: #{tpu_custom_call.1} parent=11 // pred_fallthru
          _
        // Predicated region
        $region17: #{tpu_custom_call.1} parent=11 // pred_check
          %p227 = pneg %p89
        $region18: #{tpu_custom_call.1} parent=11 // pred_check_branch
          %229 = sbr.rel (%p227) target = $region20
        $region19: #{tpu_custom_call.1} parent=11 // pred_region
          _
        $region20: #{tpu_custom_call.1} parent=11 // pred_fallthru
          _
        // Predicated region
        $region21: #{tpu_custom_call.1} parent=11 // pred_check
          %p230 = pneg %p110
        $region22: #{tpu_custom_call.1} parent=11 // pred_check_branch
          %232 = sbr.rel (%p230) target = $region24
        $region23: #{tpu_custom_call.1} parent=11 // pred_region
          %s234 = ssub.s32 1024, 1024
          %235 = vsyncadd [#allocation6], %s234
          %s236 = sshll.u32 [#allocation7], 4
          %s237 = int_to_ptr.vmem [resolvable:$true] %s236
          %242 = dma.hbm_to_vmem [thread:$0]  %s3, 1024, %s237, [#allocation6], 64, 64, 4
        $region24: #{tpu_custom_call.1} parent=11 // pred_fallthru
          _
        // Predicated region
        $region25: #{tpu_custom_call.1} parent=11 // pred_check
          %p243 = pneg %p131
        $region26: #{tpu_custom_call.1} parent=11 // pred_check_branch
          %245 = sbr.rel (%p243) target = $region28
        $region27: #{tpu_custom_call.1} parent=11 // pred_region
          _
        $region28: #{tpu_custom_call.1} parent=11 // pred_fallthru
          _
        // Predicated region
        $region29: #{tpu_custom_call.1} parent=11 // pred_check
          %p246 = pneg %p152
        $region30: #{tpu_custom_call.1} parent=11 // pred_check_branch
          %248 = sbr.rel (%p246) target = $region32
        $region31: #{tpu_custom_call.1} parent=11 // pred_region
          %s250 = ssub.s32 1024, 1024
          %251 = vsyncadd [#allocation9], %s250
          %s252 = sshll.u32 [#allocation8], 4
          %s253 = int_to_ptr.vmem [resolvable:$true] %s252
          %258 = dma.hbm_to_vmem [thread:$0]  %s5, 1024, %s253, [#allocation9], 64, 64, 4
        $region32: #{tpu_custom_call.1} parent=11 // pred_fallthru
          _
        // Predicated region
        $region33: #{tpu_custom_call.1} parent=11 // pred_check
          %p259 = pneg %p173
        $region34: #{tpu_custom_call.1} parent=11 // pred_check_branch
          %261 = sbr.rel (%p259) target = $region36
        $region35: #{tpu_custom_call.1} parent=11 // pred_region
          _
        $region36: #{tpu_custom_call.1} parent=11 // pred_fallthru
          _
      $region12: #{tpu_custom_call.1} parent=5 // pred_fallthru
        _
      %p262 = scmp.lt.s32.totalorder %s21, 2
      // Predicated region
      $region37: #{tpu_custom_call.1} parent=5 // pred_check
        %p263 = pneg %p262
      $region38: #{tpu_custom_call.1} parent=5 // pred_check_branch
        %265 = sbr.rel (%p263) target = $region40
      $region39: #{tpu_custom_call.1} parent=5 // pred_region
        // Predicated region
        $region41: #{tpu_custom_call.1} parent=39 // pred_check
          %p266 = pneg %p41
        $region42: #{tpu_custom_call.1} parent=39 // pred_check_branch
          %268 = sbr.rel (%p266) target = $region44
        $region43: #{tpu_custom_call.1} parent=39 // pred_region
          %s269 = sand.u32 %s31, 1
          %s270 = scalar_lea.sflag [#allocation3], %s269
          %s271 = sand.u32 %s31, 1
          %s272 = smul.addr %s271, 4
          %s273 = scalar_lea.vmem [#allocation2], %s272
          %s275 = ssub.s32 64, 64
          %276 = vsyncadd %s270, %s275
          %s277 = smul.addr %s21, 64
          %s278 = scalar_lea.hbm %s0, %s277
          %s280 = sshll.u32 %s273, 4
          %s281 = int_to_ptr.vmem [resolvable:$true] %s280
          %283 = dma.hbm_to_vmem [thread:$0]  %s278, 64, %s281, %s270
        $region44: #{tpu_custom_call.1} parent=39 // pred_fallthru
          _
      $region40: #{tpu_custom_call.1} parent=5 // pred_fallthru
        _
      %p284 = scmp.le.s32.totalorder 1, %s21
      %p285 = scmp.lt.s32.totalorder %s21, 3
      %p286 = pnand %p284, %p285
      %p287 = pneg %p286
      // Predicated region
      $region45: #{tpu_custom_call.1} parent=5 // pred_check
        _
      $region46: #{tpu_custom_call.1} parent=5 // pred_check_branch
        %289 = sbr.rel (%p286) target = $region48
      $region47: #{tpu_custom_call.1} parent=5 // pred_region
        %s290 = ssub.s32 %s21, 1
        %s291 = sand.u32 %s34, 1
        %s292 = scalar_lea.sflag [#allocation3], %s291
        %s293 = sand.u32 %s34, 1
        %s294 = smul.addr %s293, 4
        %s295 = scalar_lea.vmem [#allocation2], %s294
        // Predicated region
        $region49: #{tpu_custom_call.1} parent=47 // pred_check
          %p296 = pneg %p47
        $region50: #{tpu_custom_call.1} parent=47 // pred_check_branch
          %298 = sbr.rel (%p296) target = $region52
        $region51: #{tpu_custom_call.1} parent=47 // pred_region
          %299 = dma.done %s292, 64
        $region52: #{tpu_custom_call.1} parent=47 // pred_fallthru
          _
        // Predicated region
        $region53: #{tpu_custom_call.1} parent=47 // pred_check
          %p300 = pneg %p68
        $region54: #{tpu_custom_call.1} parent=47 // pred_check_branch
          %302 = sbr.rel (%p300) target = $region56
        $region55: #{tpu_custom_call.1} parent=47 // pred_region
          %303 = dma.done [#allocation6], 256
        $region56: #{tpu_custom_call.1} parent=47 // pred_fallthru
          _
        // Predicated region
        $region57: #{tpu_custom_call.1} parent=47 // pred_check
          %p304 = pneg %p110
        $region58: #{tpu_custom_call.1} parent=47 // pred_check_branch
          %306 = sbr.rel (%p304) target = $region60
        $region59: #{tpu_custom_call.1} parent=47 // pred_region
          %307 = dma.done [#allocation6], 1024
        $region60: #{tpu_custom_call.1} parent=47 // pred_fallthru
          _
        // Predicated region
        $region61: #{tpu_custom_call.1} parent=47 // pred_check
          %p308 = pneg %p152
        $region62: #{tpu_custom_call.1} parent=47 // pred_check_branch
          %310 = sbr.rel (%p308) target = $region64
        $region63: #{tpu_custom_call.1} parent=47 // pred_region
          %311 = dma.done [#allocation9], 1024
        $region64: #{tpu_custom_call.1} parent=47 // pred_fallthru
          _
        %s312 = sand.u32 %s34, 1
        %s313 = scalar_lea.sflag [#allocation3], %s312
        %s314 = sand.u32 %s34, 1
        %s315 = smul.addr %s314, 4
        %s316 = scalar_lea.vmem [#allocation2], %s315
        %p317 = pneg %p47
        %p318 = pneg %p44
        %p319 = pneg %p68
        %p320 = pneg %p65
        %p321 = pneg %p89
        %p322 = pneg %p86
        %p323 = pneg %p110
        %p324 = pneg %p107
        %p325 = pneg %p131
        %p326 = pneg %p128
        %p327 = pneg %p152
        %p328 = pneg %p149
        %p329 = pneg %p173
        %p330 = pneg %p170
        %p331 = pneg %p199
        %p332 = pneg %p196
        %s333 = sand.u32 %s186, 1
        %s334 = scalar_lea.sflag [#allocation4], %s333
        %s335 = sand.u32 %s186, 1
        %s336 = smul.addr %s335, 8
        %s337 = scalar_lea.vmem [#allocation10], %s336
        %v339 = vld [vmem:[%s295] sm:$0xf]
        %v340 = vld [vmem:[#allocation5] sm:$0xf]
        %v341 = vld [vmem:[#allocation5 + $0x4] sm:$0xf]
        %v342 = vld [vmem:[#allocation5 + $0x8] sm:$0xf]
        %v343 = vld [vmem:[#allocation5 + $0xc] sm:$0xf]
        %v344 = vld [vmem:[%s2] sm:$0x1]
        %v346 = vlaneseq
        %v347 = vshrl.u32 %v346, 7
        %v348 = vsub.s32 0, %v347
        %v349 = vrot.slane %v344, %v348
        %v355 = vunpack.c.l.b16 %v340
        %v356 = vunpack.c.l.b16 %v341
        %v357 = vunpack.c.l.b16 %v342
        %v358 = vunpack.c.l.b16 %v343
        %v359 = vpack.c.b16 %v356, %v355
        %v360 = vpack.c.b16 %v358, %v357
        %vm363 = vcmask 261120
        %v365 = vsel %vm363, %v339, 0
        %367 = vmatprep.subr.bf16.mxu0 0
        %368 = vmatpush1.bf16.msra.mxu0 %v359
        %369 = vmatprep.subr.bf16.mxu0 0
        %370 = vmatpush1.bf16.msra.mxu0 %v360
        %371 = vmatprep.subr.bf16.mxu0 0
        %372 = vmatpush1.bf16.msra.mxu0 0
        %373 = vmatprep.subr.bf16.mxu0 0
        %374 = vmatpush1.bf16.msra.mxu0 0
        %375 = vmatprep.subr.bf16.mxu0 0
        %376 = vmatpush1.bf16.msra.mxu0 0
        %377 = vmatprep.subr.bf16.mxu0 0
        %378 = vmatpush1.bf16.msra.mxu0 0
        %379 = vmatprep.subr.bf16.mxu0 0
        %380 = vmatpush1.bf16.msra.mxu0 0
        %381 = vmatprep.subr.bf16.mxu0 0
        %382 = vmatpush1.bf16.msra.mxu0 0
        %383 = vmatprep.subr.bf16.mxu0 0
        %384 = vmatpush1.bf16.msra.mxu0 0
        %385 = vmatprep.subr.bf16.mxu0 0
        %386 = vmatpush1.bf16.msra.mxu0 0
        %387 = vmatprep.subr.bf16.mxu0 0
        %388 = vmatpush1.bf16.msra.mxu0 0
        %389 = vmatprep.subr.bf16.mxu0 0
        %390 = vmatpush1.bf16.msra.mxu0 0
        %391 = vmatprep.subr.bf16.mxu0 0
        %392 = vmatpush1.bf16.msra.mxu0 0
        %393 = vmatprep.subr.bf16.mxu0 0
        %394 = vmatpush1.bf16.msra.mxu0 0
        %395 = vmatprep.subr.bf16.mxu0 0
        %396 = vmatpush1.bf16.msra.mxu0 0
        %397 = vmatprep.subr.bf16.mxu0 0
        %398 = vmatpush1.bf16.msra.mxu0 0
        %399 = vmatprep.mubr.bf16.mxu0 0
        %400 = vmatmul.mubr.bf16.gmra.mrb[0].mxu0 %v365
        %v401 = vpop.f32.mrb[0].mxu0
        %v402 = vadd.f32 %v349, %v401
        %v403 = vpop.f32.mrb[0].mxu0
        %v404 = vpop.f32.mrb[0].mxu0
        %v405 = vpop.f32.mrb[0].mxu0
        %406 = vdwg.mxu0
        %v407 = vmax.f32 %v402, 0.0
        %v408 = vpack.c.bf16 %v407, %v407
        %v409 = vld [vmem:[#allocation7] sm:$0xf]
        %v410 = vld [vmem:[#allocation7 + $0x4] sm:$0xf]
        %v411 = vld [vmem:[#allocation7 + $0x8] sm:$0xf]
        %v412 = vld [vmem:[#allocation7 + $0xc] sm:$0xf]
        %v413 = vld [vmem:[#allocation7 + $0x10] sm:$0xf]
        %v414 = vld [vmem:[#allocation7 + $0x14] sm:$0xf]
        %v415 = vld [vmem:[#allocation7 + $0x18] sm:$0xf]
        %v416 = vld [vmem:[#allocation7 + $0x1c] sm:$0xf]
        %v417 = vld [vmem:[#allocation7 + $0x20] sm:$0xf]
        %v418 = vld [vmem:[#allocation7 + $0x24] sm:$0xf]
        %v419 = vld [vmem:[#allocation7 + $0x28] sm:$0xf]
        %v420 = vld [vmem:[#allocation7 + $0x2c] sm:$0xf]
        %v421 = vld [vmem:[#allocation7 + $0x30] sm:$0xf]
        %v422 = vld [vmem:[#allocation7 + $0x34] sm:$0xf]
        %v423 = vld [vmem:[#allocation7 + $0x38] sm:$0xf]
        %v424 = vld [vmem:[#allocation7 + $0x3c] sm:$0xf]
        %v425 = vld [vmem:[%s4] sm:$0x1]
        %v427 = vlaneseq
        %v428 = vshrl.u32 %v427, 7
        %v429 = vsub.s32 0, %v428
        %v430 = vrot.slane %v425, %v429
        %v448 = vunpack.c.l.b16 %v409
        %v449 = vunpack.c.l.b16 %v410
        %v450 = vunpack.c.l.b16 %v411
        %v451 = vunpack.c.l.b16 %v412
        %v452 = vunpack.c.l.b16 %v413
        %v453 = vunpack.c.l.b16 %v414
        %v454 = vunpack.c.l.b16 %v415
        %v455 = vunpack.c.l.b16 %v416
        %v456 = vunpack.c.l.b16 %v417
        %v457 = vunpack.c.l.b16 %v418
        %v458 = vunpack.c.l.b16 %v419
        %v459 = vunpack.c.l.b16 %v420
        %v460 = vunpack.c.l.b16 %v421
        %v461 = vunpack.c.l.b16 %v422
        %v462 = vunpack.c.l.b16 %v423
        %v463 = vunpack.c.l.b16 %v424
        %v464 = vpack.c.b16 %v449, %v448
        %v465 = vpack.c.b16 %v451, %v450
        %v466 = vpack.c.b16 %v453, %v452
        %v467 = vpack.c.b16 %v455, %v454
        %v468 = vpack.c.b16 %v457, %v456
        %v469 = vpack.c.b16 %v459, %v458
        %v470 = vpack.c.b16 %v461, %v460
        %v471 = vpack.c.b16 %v463, %v462
        %480 = vmatprep.subr.bf16.mxu0 0
        %481 = vmatpush1.bf16.msra.mxu0 %v464
        %482 = vmatprep.subr.bf16.mxu0 0
        %483 = vmatpush1.bf16.msra.mxu0 %v465
        %484 = vmatprep.subr.bf16.mxu0 0
        %485 = vmatpush1.bf16.msra.mxu0 %v466
        %486 = vmatprep.subr.bf16.mxu0 0
        %487 = vmatpush1.bf16.msra.mxu0 %v467
        %488 = vmatprep.subr.bf16.mxu0 0
        %489 = vmatpush1.bf16.msra.mxu0 %v468
        %490 = vmatprep.subr.bf16.mxu0 0
        %491 = vmatpush1.bf16.msra.mxu0 %v469
        %492 = vmatprep.subr.bf16.mxu0 0
        %493 = vmatpush1.bf16.msra.mxu0 %v470
        %494 = vmatprep.subr.bf16.mxu0 0
        %495 = vmatpush1.bf16.msra.mxu0 %v471
        %496 = vmatprep.subr.bf16.mxu0 0
        %497 = vmatpush1.bf16.msra.mxu0 0
        %498 = vmatprep.subr.bf16.mxu0 0
        %499 = vmatpush1.bf16.msra.mxu0 0
        %500 = vmatprep.subr.bf16.mxu0 0
        %501 = vmatpush1.bf16.msra.mxu0 0
        %502 = vmatprep.subr.bf16.mxu0 0
        %503 = vmatpush1.bf16.msra.mxu0 0
        %504 = vmatprep.subr.bf16.mxu0 0
        %505 = vmatpush1.bf16.msra.mxu0 0
        %506 = vmatprep.subr.bf16.mxu0 0
        %507 = vmatpush1.bf16.msra.mxu0 0
        %508 = vmatprep.subr.bf16.mxu0 0
        %509 = vmatpush1.bf16.msra.mxu0 0
        %510 = vmatprep.subr.bf16.mxu0 0
        %511 = vmatpush1.bf16.msra.mxu0 0
        %512 = vmatprep.mubr.bf16.mxu0 0
        %513 = vmatmul.mubr.bf16.gmra.mrb[0].mxu0 %v408
        %v514 = vpop.f32.mrb[0].mxu0
        %v515 = vadd.f32 %v430, %v514
        %v516 = vpop.f32.mrb[0].mxu0
        %v517 = vpop.f32.mrb[0].mxu0
        %v518 = vpop.f32.mrb[0].mxu0
        %519 = vdwg.mxu0
        %v520 = vmax.f32 %v515, 0.0
        %v521 = vpack.c.bf16 %v520, %v520
        %v522 = vld [vmem:[#allocation8] sm:$0xf]
        %v523 = vld [vmem:[#allocation8 + $0x4] sm:$0xf]
        %v524 = vld [vmem:[#allocation8 + $0x8] sm:$0xf]
        %v525 = vld [vmem:[#allocation8 + $0xc] sm:$0xf]
        %v526 = vld [vmem:[#allocation8 + $0x10] sm:$0xf]
        %v527 = vld [vmem:[#allocation8 + $0x14] sm:$0xf]
        %v528 = vld [vmem:[#allocation8 + $0x18] sm:$0xf]
        %v529 = vld [vmem:[#allocation8 + $0x1c] sm:$0xf]
        %v530 = vld [vmem:[#allocation8 + $0x20] sm:$0xf]
        %v531 = vld [vmem:[#allocation8 + $0x24] sm:$0xf]
        %v532 = vld [vmem:[#allocation8 + $0x28] sm:$0xf]
        %v533 = vld [vmem:[#allocation8 + $0x2c] sm:$0xf]
        %v534 = vld [vmem:[#allocation8 + $0x30] sm:$0xf]
        %v535 = vld [vmem:[#allocation8 + $0x34] sm:$0xf]
        %v536 = vld [vmem:[#allocation8 + $0x38] sm:$0xf]
        %v537 = vld [vmem:[#allocation8 + $0x3c] sm:$0xf]
        %v538 = vld [vmem:[%s6] sm:$0x1]
        %v540 = vlaneseq
        %v541 = vshrl.u32 %v540, 7
        %v542 = vsub.s32 0, %v541
        %v543 = vrot.slane %v538, %v542
        %v561 = vunpack.c.l.b16 %v522
        %v562 = vunpack.c.l.b16 %v523
        %v563 = vunpack.c.l.b16 %v524
        %v564 = vunpack.c.l.b16 %v525
        %v565 = vunpack.c.l.b16 %v526
        %v566 = vunpack.c.l.b16 %v527
        %v567 = vunpack.c.l.b16 %v528
        %v568 = vunpack.c.l.b16 %v529
        %v569 = vunpack.c.l.b16 %v530
        %v570 = vunpack.c.l.b16 %v531
        %v571 = vunpack.c.l.b16 %v532
        %v572 = vunpack.c.l.b16 %v533
        %v573 = vunpack.c.l.b16 %v534
        %v574 = vunpack.c.l.b16 %v535
        %v575 = vunpack.c.l.b16 %v536
        %v576 = vunpack.c.l.b16 %v537
        %v577 = vpack.c.b16 %v562, %v561
        %v578 = vpack.c.b16 %v564, %v563
        %v579 = vpack.c.b16 %v566, %v565
        %v580 = vpack.c.b16 %v568, %v567
        %v581 = vpack.c.b16 %v570, %v569
        %v582 = vpack.c.b16 %v572, %v571
        %v583 = vpack.c.b16 %v574, %v573
        %v584 = vpack.c.b16 %v576, %v575
        %593 = vmatprep.subr.bf16.mxu0 0
        %594 = vmatpush1.bf16.msra.mxu0 %v577
        %595 = vmatprep.subr.bf16.mxu0 0
        %596 = vmatpush1.bf16.msra.mxu0 %v578
        %597 = vmatprep.subr.bf16.mxu0 0
        %598 = vmatpush1.bf16.msra.mxu0 %v579
        %599 = vmatprep.subr.bf16.mxu0 0
        %600 = vmatpush1.bf16.msra.mxu0 %v580
        %601 = vmatprep.subr.bf16.mxu0 0
        %602 = vmatpush1.bf16.msra.mxu0 %v581
        %603 = vmatprep.subr.bf16.mxu0 0
        %604 = vmatpush1.bf16.msra.mxu0 %v582
        %605 = vmatprep.subr.bf16.mxu0 0
        %606 = vmatpush1.bf16.msra.mxu0 %v583
        %607 = vmatprep.subr.bf16.mxu0 0
        %608 = vmatpush1.bf16.msra.mxu0 %v584
        %609 = vmatprep.subr.bf16.mxu0 0
        %610 = vmatpush1.bf16.msra.mxu0 0
        %611 = vmatprep.subr.bf16.mxu0 0
        %612 = vmatpush1.bf16.msra.mxu0 0
        %613 = vmatprep.subr.bf16.mxu0 0
        %614 = vmatpush1.bf16.msra.mxu0 0
        %615 = vmatprep.subr.bf16.mxu0 0
        %616 = vmatpush1.bf16.msra.mxu0 0
        %617 = vmatprep.subr.bf16.mxu0 0
        %618 = vmatpush1.bf16.msra.mxu0 0
        %619 = vmatprep.subr.bf16.mxu0 0
        %620 = vmatpush1.bf16.msra.mxu0 0
        %621 = vmatprep.subr.bf16.mxu0 0
        %622 = vmatpush1.bf16.msra.mxu0 0
        %623 = vmatprep.subr.bf16.mxu0 0
        %624 = vmatpush1.bf16.msra.mxu0 0
        %625 = vmatprep.mubr.bf16.mxu0 0
        %626 = vmatmul.mubr.bf16.gmra.mrb[0].mxu0 %v521
        %v627 = vpop.f32.mrb[0].mxu0
        %v628 = vadd.f32 %v543, %v627
        %v629 = vpop.f32.mrb[0].mxu0
        %v630 = vpop.f32.mrb[0].mxu0
        %v631 = vpop.f32.mrb[0].mxu0
        %632 = vdwg.mxu0
        %633 = vst [vmem:[%s337] sm:$0xff] %v628
        %s634 = sand.u32 %s186, 1
        %s635 = scalar_lea.sflag [#allocation4], %s634
        %s636 = sand.u32 %s186, 1
        %s637 = smul.addr %s636, 8
        %s638 = scalar_lea.vmem [#allocation10], %s637
        // Predicated region
        $region65: #{tpu_custom_call.1} parent=47 // pred_check
          %p639 = pneg %p196
        $region66: #{tpu_custom_call.1} parent=47 // pred_check_branch
          %641 = sbr.rel (%p639) target = $region68
        $region67: #{tpu_custom_call.1} parent=47 // pred_region
          %s643 = ssub.s32 128, 128
          %644 = vsyncadd %s635, %s643
          %s645 = smul.addr %s26, 128
          %s646 = scalar_lea.hbm %s7, %s645
          %s648 = sshll.u32 %s638, 4
          %s649 = int_to_ptr.vmem [resolvable:$true] %s648
          %651 = dma.vmem_to_hbm [thread:$0]  %s649, 128, %s646, %s635
        $region68: #{tpu_custom_call.1} parent=47 // pred_fallthru
          _
      $region48: #{tpu_custom_call.1} parent=5 // pred_fallthru
        _
      %p652 = scmp.le.s32.totalorder 2, %s21
      // Predicated region
      $region69: #{tpu_custom_call.1} parent=5 // pred_check
        %p653 = pneg %p652
      $region70: #{tpu_custom_call.1} parent=5 // pred_check_branch
        %655 = sbr.rel (%p653) target = $region72
      $region71: #{tpu_custom_call.1} parent=5 // pred_region
        %s656 = ssub.s32 %s21, 2
        // Predicated region
        $region73: #{tpu_custom_call.1} parent=71 // pred_check
          %p657 = pneg %p202
        $region74: #{tpu_custom_call.1} parent=71 // pred_check_branch
          %659 = sbr.rel (%p657) target = $region76
        $region75: #{tpu_custom_call.1} parent=71 // pred_region
          %s660 = sand.u32 %s187, 1
          %s661 = scalar_lea.sflag [#allocation4], %s660
          %s662 = sand.u32 %s187, 1
          %s663 = smul.addr %s662, 8
          %s664 = scalar_lea.vmem [#allocation10], %s663
          %665 = dma.done %s661, 128
        $region76: #{tpu_custom_call.1} parent=71 // pred_fallthru
          _
      $region72: #{tpu_custom_call.1} parent=5 // pred_fallthru
        _
    $region6: #{tpu_custom_call.1} parent=1 // loop_footer
      %s25 = sadd.s32 1, %s21
    $region7: #{tpu_custom_call.1} parent=1 // loop_footer_branch
      %20 = sbr.rel target = $region3
    $region8: #{tpu_custom_call.1} parent=1 // loop_exit
      _
    %666 = vsyncpa [#allocation3], 1
    %s667 = scalar_lea.sflag [#allocation3], 1
    %668 = vsyncpa %s667, 1
    %669 = vsyncpa [#allocation6], 1
    %670 = vsyncpa [#allocation9], 1
    %671 = vsyncpa [#allocation4], 1
    %s672 = scalar_lea.sflag [#allocation4], 1
    %673 = vsyncpa %s672, 1

// kernel: tpu_custom_call.1
$region0: #{tpu_custom_call.1}
  #allocation0 [shape = 'u32[]', space=smem, size = 0x4, offset = 0x4, fixed_abs, tag = 'smem constant byte address 0x4 - core index']
  #allocation1 [shape = 'u32[144,128]{1,0:T(1,128)}', space=vmem, size = 0x12000, scoped, tag = 'internal scratch']
  %s0 = inlined_call_operand.hbm [shape: bf16[16,32], index: 0, kind: input, shape index: {}]
  %s1 = inlined_call_operand.hbm [shape: bf16[32,128], index: 1, kind: input, shape index: {}]
  %s2 = inlined_call_operand.vmem [shape: f32[1,128], index: 2, kind: input, shape index: {}]
  %s3 = inlined_call_operand.hbm [shape: bf16[128,128], index: 3, kind: input, shape index: {}]
  %s4 = inlined_call_operand.vmem [shape: f32[1,128], index: 4, kind: input, shape index: {}]
  %s5 = inlined_call_operand.hbm [shape: bf16[128,128], index: 5, kind: input, shape index: {}]
  %s6 = inlined_call_operand.vmem [shape: f32[1,128], index: 6, kind: input, shape index: {}]
  %s7 = inlined_call_operand.hbm [shape: f32[16,128], index: 7, kind: output, shape index: {}]
  %s8 = sld [smem:[#allocation0]]
  $region77: #{tpu_custom_call.1} parent=0
    _
  %s10 = ssub.s32 1, %s8
  %s11 = scalar_select 0, %s10, %s8
  $region1: #{tpu_custom_call.1} parent=0
    #allocation2 [shape = 'u8[4096]{0}', space=vmem, size = 0x1000, scoped, tag = 'input window, operand 0']
    #allocation3 [shape = 's32[2]{0}', space=sflag, size = 0x8, scoped, tag = 'scoped memory for tpu_custom_call.1']
    #allocation4 [shape = 's32[2]{0}', space=sflag, size = 0x8, scoped, tag = 'scoped memory for tpu_custom_call.1']
    #allocation5 [shape = 'u8[8192]{0}', space=vmem, size = 0x2000, scoped, tag = 'input window, operand 1, single buffered']
    #allocation6 [shape = 's32[1]{0}', space=sflag, size = 0x4, scoped, tag = 'scoped memory for tpu_custom_call.1']
    #allocation7 [shape = 'u8[32768]{0}', space=vmem, size = 0x8000, scoped, tag = 'input window, operand 3, single buffered']
    #allocation8 [shape = 'u8[32768]{0}', space=vmem, size = 0x8000, scoped, tag = 'input window, operand 5, single buffered']
    #allocation9 [shape = 's32[1]{0}', space=sflag, size = 0x4, scoped, tag = 'scoped memory for tpu_custom_call.1']
    #allocation10 [shape = 'u8[8192]{0}', space=vmem, size = 0x2000, scoped, tag = 'output window, operand 0']
    %12 = vsyncpa [#allocation3], 0
    %s13 = scalar_lea.sflag [#allocation3], 1
    %14 = vsyncpa %s13, 0
    %15 = vsyncpa [#allocation6], 0
    %16 = vsyncpa [#allocation9], 0
    %17 = vsyncpa [#allocation4], 0
    %s18 = scalar_lea.sflag [#allocation4], 1
    %19 = vsyncpa %s18, 0
    loop: start=0, step=1, limit=4
    $region2: #{tpu_custom_call.1} parent=1 // loop_pre_header
      _
    $region3: #{tpu_custom_call.1} parent=1 // loop_header
      %s21 = sphi 0, %s25
      %p22 = scmp.ge.s32.totalorder %s21, 4
      %s31 = sphi 0, %s33
      %s34 = sphi 0, %s31
      %s35 = sphi 0, %s34
      %s51 = sphi 0, %s35
      %s55 = sphi 0, %s55
      %s57 = sphi 0, %s55
      %s58 = sphi 0, %s57
      %s72 = sphi 0, %s58
      %s76 = sphi 0, %s76
      %s78 = sphi 0, %s76
      %s79 = sphi 0, %s78
      %s93 = sphi 0, %s79
      %s97 = sphi 0, %s97
      %s99 = sphi 0, %s97
      %s100 = sphi 0, %s99
      %s114 = sphi 0, %s100
      %s118 = sphi 0, %s118
      %s120 = sphi 0, %s118
      %s121 = sphi 0, %s120
      %s135 = sphi 0, %s121
      %s139 = sphi 0, %s139
      %s141 = sphi 0, %s139
      %s142 = sphi 0, %s141
      %s156 = sphi 0, %s142
      %s160 = sphi 0, %s160
      %s162 = sphi 0, %s160
      %s163 = sphi 0, %s162
      %s177 = sphi 0, %s163
      %s183 = sphi 0, %s185
      %s186 = sphi 0, %s183
      %s187 = sphi 0, %s186
      %s203 = sphi 0, %s187
    $region4: #{tpu_custom_call.1} parent=1 // loop_header_branch
      %24 = sbr.rel (%p22) target = $region8
    $region5: #{tpu_custom_call.1} parent=1 // loop_body
      %s26 = ssub.s32 %s21, 1
      %s27 = ssub.s32 %s21, 2
      %s28 = sadd.s32 %s21, 1
      %s29 = ssub.s32 %s21, %s28
      %p30 = scmp.eq.s32.totalorder %s29, 0
      %s32 = sadd.s32 %s31, 1
      %s33 = scalar_select %p30, %s31, %s32
      %p36 = pneg %p30
      %p37 = scmp.eq.s32.totalorder %s21, 1
      %p38 = por %p36, %p37
      %p39 = scmp.ne.s32.totalorder %s31, %s34
      %p40 = scmp.eq.s32.totalorder %s21, 0
      %p41 = por %p39, %p40
      %p42 = scmp.ne.s32.totalorder %s31, %s34
      %p43 = scmp.eq.s32.totalorder %s26, 1
      %p44 = por %p42, %p43
      %p45 = scmp.ne.s32.totalorder %s34, %s35
      %p46 = scmp.eq.s32.totalorder %s26, 0
      %p47 = por %p45, %p46
      %p48 = scmp.ne.s32.totalorder %s34, %s35
      %p49 = scmp.eq.s32.totalorder %s27, 1
      %p50 = por %p48, %p49
      %p52 = scmp.ne.s32.totalorder %s35, %s51
      %p53 = scmp.eq.s32.totalorder %s27, 0
      %p54 = por %p52, %p53
      %s56 = sadd.s32 %s55, 1
      %p59 = scmp.eq.s32.totalorder %s21, 1
      %p60 = scmp.ne.s32.totalorder %s55, %s57
      %p61 = scmp.eq.s32.totalorder %s21, 0
      %p62 = por %p60, %p61
      %p63 = scmp.ne.s32.totalorder %s55, %s57
      %p64 = scmp.eq.s32.totalorder %s26, 1
      %p65 = por %p63, %p64
      %p66 = scmp.ne.s32.totalorder %s57, %s58
      %p67 = scmp.eq.s32.totalorder %s26, 0
      %p68 = por %p66, %p67
      %p69 = scmp.ne.s32.totalorder %s57, %s58
      %p70 = scmp.eq.s32.totalorder %s27, 1
      %p71 = por %p69, %p70
      %p73 = scmp.ne.s32.totalorder %s58, %s72
      %p74 = scmp.eq.s32.totalorder %s27, 0
      %p75 = por %p73, %p74
      %s77 = sadd.s32 %s76, 1
      %p80 = scmp.eq.s32.totalorder %s21, 1
      %p81 = scmp.ne.s32.totalorder %s76, %s78
      %p82 = scmp.eq.s32.totalorder %s21, 0
      %p83 = por %p81, %p82
      %p84 = scmp.ne.s32.totalorder %s76, %s78
      %p85 = scmp.eq.s32.totalorder %s26, 1
      %p86 = por %p84, %p85
      %p87 = scmp.ne.s32.totalorder %s78, %s79
      %p88 = scmp.eq.s32.totalorder %s26, 0
      %p89 = por %p87, %p88
      %p90 = scmp.ne.s32.totalorder %s78, %s79
      %p91 = scmp.eq.s32.totalorder %s27, 1
      %p92 = por %p90, %p91
      %p94 = scmp.ne.s32.totalorder %s79, %s93
      %p95 = scmp.eq.s32.totalorder %s27, 0
      %p96 = por %p94, %p95
      %s98 = sadd.s32 %s97, 1
      %p101 = scmp.eq.s32.totalorder %s21, 1
      %p102 = scmp.ne.s32.totalorder %s97, %s99
      %p103 = scmp.eq.s32.totalorder %s21, 0
      %p104 = por %p102, %p103
      %p105 = scmp.ne.s32.totalorder %s97, %s99
      %p106 = scmp.eq.s32.totalorder %s26, 1
      %p107 = por %p105, %p106
      %p108 = scmp.ne.s32.totalorder %s99, %s100
      %p109 = scmp.eq.s32.totalorder %s26, 0
      %p110 = por %p108, %p109
      %p111 = scmp.ne.s32.totalorder %s99, %s100
      %p112 = scmp.eq.s32.totalorder %s27, 1
      %p113 = por %p111, %p112
      %p115 = scmp.ne.s32.totalorder %s100, %s114
      %p116 = scmp.eq.s32.totalorder %s27, 0
      %p117 = por %p115, %p116
      %s119 = sadd.s32 %s118, 1
      %p122 = scmp.eq.s32.totalorder %s21, 1
      %p123 = scmp.ne.s32.totalorder %s118, %s120
      %p124 = scmp.eq.s32.totalorder %s21, 0
      %p125 = por %p123, %p124
      %p126 = scmp.ne.s32.totalorder %s118, %s120
      %p127 = scmp.eq.s32.totalorder %s26, 1
      %p128 = por %p126, %p127
      %p129 = scmp.ne.s32.totalorder %s120, %s121
      %p130 = scmp.eq.s32.totalorder %s26, 0
      %p131 = por %p129, %p130
      %p132 = scmp.ne.s32.totalorder %s120, %s121
      %p133 = scmp.eq.s32.totalorder %s27, 1
      %p134 = por %p132, %p133
      %p136 = scmp.ne.s32.totalorder %s121, %s135
      %p137 = scmp.eq.s32.totalorder %s27, 0
      %p138 = por %p136, %p137
      %s140 = sadd.s32 %s139, 1
      %p143 = scmp.eq.s32.totalorder %s21, 1
      %p144 = scmp.ne.s32.totalorder %s139, %s141
      %p145 = scmp.eq.s32.totalorder %s21, 0
      %p146 = por %p144, %p145
      %p147 = scmp.ne.s32.totalorder %s139, %s141
      %p148 = scmp.eq.s32.totalorder %s26, 1
      %p149 = por %p147, %p148
      %p150 = scmp.ne.s32.totalorder %s141, %s142
      %p151 = scmp.eq.s32.totalorder %s26, 0
      %p152 = por %p150, %p151
      %p153 = scmp.ne.s32.totalorder %s141, %s142
      %p154 = scmp.eq.s32.totalorder %s27, 1
      %p155 = por %p153, %p154
      %p157 = scmp.ne.s32.totalorder %s142, %s156
      %p158 = scmp.eq.s32.totalorder %s27, 0
      %p159 = por %p157, %p158
      %s161 = sadd.s32 %s160, 1
      %p164 = scmp.eq.s32.totalorder %s21, 1
      %p165 = scmp.ne.s32.totalorder %s160, %s162
      %p166 = scmp.eq.s32.totalorder %s21, 0
      %p167 = por %p165, %p166
      %p168 = scmp.ne.s32.totalorder %s160, %s162
      %p169 = scmp.eq.s32.totalorder %s26, 1
      %p170 = por %p168, %p169
      %p171 = scmp.ne.s32.totalorder %s162, %s163
      %p172 = scmp.eq.s32.totalorder %s26, 0
      %p173 = por %p171, %p172
      %p174 = scmp.ne.s32.totalorder %s162, %s163
      %p175 = scmp.eq.s32.totalorder %s27, 1
      %p176 = por %p174, %p175
      %p178 = scmp.ne.s32.totalorder %s163, %s177
      %p179 = scmp.eq.s32.totalorder %s27, 0
      %p180 = por %p178, %p179
      %s181 = ssub.s32 %s21, %s28
      %p182 = scmp.eq.s32.totalorder %s181, 0
      %s184 = sadd.s32 %s183, 1
      %s185 = scalar_select %p182, %s183, %s184
      %p188 = pneg %p182
      %p189 = scmp.eq.s32.totalorder %s21, 1
      %p190 = por %p188, %p189
      %p191 = scmp.ne.s32.totalorder %s183, %s186
      %p192 = scmp.eq.s32.totalorder %s21, 0
      %p193 = por %p191, %p192
      %p194 = scmp.ne.s32.totalorder %s183, %s186
      %p195 = scmp.eq.s32.totalorder %s26, 1
      %p196 = por %p194, %p195
      %p197 = scmp.ne.s32.totalorder %s186, %s187
      %p198 = scmp.eq.s32.totalorder %s26, 0
      %p199 = por %p197, %p198
      %p200 = scmp.ne.s32.totalorder %s186, %s187
      %p201 = scmp.eq.s32.totalorder %s27, 1
      %p202 = por %p200, %p201
      %p204 = scmp.ne.s32.totalorder %s187, %s203
      %p205 = scmp.eq.s32.totalorder %s27, 0
      %p206 = por %p204, %p205
      %p207 = scmp.le.s32.totalorder 1, %s21
      %p208 = scmp.lt.s32.totalorder %s21, 3
      %p209 = pnand %p207, %p208
      %p210 = pneg %p209
      // Predicated region
      $region9: #{tpu_custom_call.1} parent=5 // pred_check
        _
      $region10: #{tpu_custom_call.1} parent=5 // pred_check_branch
        %212 = sbr.rel (%p209) target = $region12
      $region11: #{tpu_custom_call.1} parent=5 // pred_region
        %s213 = ssub.s32 %s21, 1
        // Predicated region
        $region13: #{tpu_custom_call.1} parent=11 // pred_check
          %p214 = pneg %p68
        $region14: #{tpu_custom_call.1} parent=11 // pred_check_branch
          %216 = sbr.rel (%p214) target = $region16
        $region15: #{tpu_custom_call.1} parent=11 // pred_region
          %s218 = ssub.s32 256, 256
          %219 = vsyncadd [#allocation6], %s218
          %s220 = sshll.u32 [#allocation5], 4
          %s221 = int_to_ptr.vmem [resolvable:$true] %s220
          %226 = dma.hbm_to_vmem [thread:$0]  %s1, 256, %s221, [#allocation6], 64, 64, 4
        $region16: #{tpu_custom_call.1} parent=11 // pred_fallthru
          _
        // Predicated region
        $region17: #{tpu_custom_call.1} parent=11 // pred_check
          %p227 = pneg %p89
        $region18: #{tpu_custom_call.1} parent=11 // pred_check_branch
          %229 = sbr.rel (%p227) target = $region20
        $region19: #{tpu_custom_call.1} parent=11 // pred_region
          _
        $region20: #{tpu_custom_call.1} parent=11 // pred_fallthru
          _
        // Predicated region
        $region21: #{tpu_custom_call.1} parent=11 // pred_check
          %p230 = pneg %p110
        $region22: #{tpu_custom_call.1} parent=11 // pred_check_branch
          %232 = sbr.rel (%p230) target = $region24
        $region23: #{tpu_custom_call.1} parent=11 // pred_region
          %s234 = ssub.s32 1024, 1024
          %235 = vsyncadd [#allocation6], %s234
          %s236 = sshll.u32 [#allocation7], 4
          %s237 = int_to_ptr.vmem [resolvable:$true] %s236
          %242 = dma.hbm_to_vmem [thread:$0]  %s3, 1024, %s237, [#allocation6], 64, 64, 4
        $region24: #{tpu_custom_call.1} parent=11 // pred_fallthru
          _
        // Predicated region
        $region25: #{tpu_custom_call.1} parent=11 // pred_check
          %p243 = pneg %p131
        $region26: #{tpu_custom_call.1} parent=11 // pred_check_branch
          %245 = sbr.rel (%p243) target = $region28
        $region27: #{tpu_custom_call.1} parent=11 // pred_region
          _
        $region28: #{tpu_custom_call.1} parent=11 // pred_fallthru
          _
        // Predicated region
        $region29: #{tpu_custom_call.1} parent=11 // pred_check
          %p246 = pneg %p152
        $region30: #{tpu_custom_call.1} parent=11 // pred_check_branch
          %248 = sbr.rel (%p246) target = $region32
        $region31: #{tpu_custom_call.1} parent=11 // pred_region
          %s250 = ssub.s32 1024, 1024
          %251 = vsyncadd [#allocation9], %s250
          %s252 = sshll.u32 [#allocation8], 4
          %s253 = int_to_ptr.vmem [resolvable:$true] %s252
          %258 = dma.hbm_to_vmem [thread:$0]  %s5, 1024, %s253, [#allocation9], 64, 64, 4
        $region32: #{tpu_custom_call.1} parent=11 // pred_fallthru
          _
        // Predicated region
        $region33: #{tpu_custom_call.1} parent=11 // pred_check
          %p259 = pneg %p173
        $region34: #{tpu_custom_call.1} parent=11 // pred_check_branch
          %261 = sbr.rel (%p259) target = $region36
        $region35: #{tpu_custom_call.1} parent=11 // pred_region
          _
        $region36: #{tpu_custom_call.1} parent=11 // pred_fallthru
          _
      $region12: #{tpu_custom_call.1} parent=5 // pred_fallthru
        _
      %p262 = scmp.lt.s32.totalorder %s21, 2
      // Predicated region
      $region37: #{tpu_custom_call.1} parent=5 // pred_check
        %p263 = pneg %p262
      $region38: #{tpu_custom_call.1} parent=5 // pred_check_branch
        %265 = sbr.rel (%p263) target = $region40
      $region39: #{tpu_custom_call.1} parent=5 // pred_region
        // Predicated region
        $region41: #{tpu_custom_call.1} parent=39 // pred_check
          %p266 = pneg %p41
        $region42: #{tpu_custom_call.1} parent=39 // pred_check_branch
          %268 = sbr.rel (%p266) target = $region44
        $region43: #{tpu_custom_call.1} parent=39 // pred_region
          %s269 = sand.u32 %s31, 1
          %s270 = scalar_lea.sflag [#allocation3], %s269
          %s271 = sand.u32 %s31, 1
          %s272 = smul.addr %s271, 4
          %s273 = scalar_lea.vmem [#allocation2], %s272
          %s275 = ssub.s32 64, 64
          %276 = vsyncadd %s270, %s275
          %s277 = smul.addr %s21, 64
          %s278 = scalar_lea.hbm %s0, %s277
          %s280 = sshll.u32 %s273, 4
          %s281 = int_to_ptr.vmem [resolvable:$true] %s280
          %283 = dma.hbm_to_vmem [thread:$0]  %s278, 64, %s281, %s270
        $region44: #{tpu_custom_call.1} parent=39 // pred_fallthru
          _
      $region40: #{tpu_custom_call.1} parent=5 // pred_fallthru
        _
      %p284 = scmp.le.s32.totalorder 1, %s21
      %p285 = scmp.lt.s32.totalorder %s21, 3
      %p286 = pnand %p284, %p285
      %p287 = pneg %p286
      // Predicated region
      $region45: #{tpu_custom_call.1} parent=5 // pred_check
        _
      $region46: #{tpu_custom_call.1} parent=5 // pred_check_branch
        %289 = sbr.rel (%p286) target = $region48
      $region47: #{tpu_custom_call.1} parent=5 // pred_region
        %s290 = ssub.s32 %s21, 1
        %s291 = sand.u32 %s34, 1
        %s292 = scalar_lea.sflag [#allocation3], %s291
        %s293 = sand.u32 %s34, 1
        %s294 = smul.addr %s293, 4
        %s295 = scalar_lea.vmem [#allocation2], %s294
        // Predicated region
        $region49: #{tpu_custom_call.1} parent=47 // pred_check
          %p296 = pneg %p47
        $region50: #{tpu_custom_call.1} parent=47 // pred_check_branch
          %298 = sbr.rel (%p296) target = $region52
        $region51: #{tpu_custom_call.1} parent=47 // pred_region
          %299 = dma.done %s292, 64
        $region52: #{tpu_custom_call.1} parent=47 // pred_fallthru
          _
        // Predicated region
        $region53: #{tpu_custom_call.1} parent=47 // pred_check
          %p300 = pneg %p68
        $region54: #{tpu_custom_call.1} parent=47 // pred_check_branch
          %302 = sbr.rel (%p300) target = $region56
        $region55: #{tpu_custom_call.1} parent=47 // pred_region
          %303 = dma.done [#allocation6], 256
        $region56: #{tpu_custom_call.1} parent=47 // pred_fallthru
          _
        // Predicated region
        $region57: #{tpu_custom_call.1} parent=47 // pred_check
          %p304 = pneg %p110
        $region58: #{tpu_custom_call.1} parent=47 // pred_check_branch
          %306 = sbr.rel (%p304) target = $region60
        $region59: #{tpu_custom_call.1} parent=47 // pred_region
          %307 = dma.done [#allocation6], 1024
        $region60: #{tpu_custom_call.1} parent=47 // pred_fallthru
          _
        // Predicated region
        $region61: #{tpu_custom_call.1} parent=47 // pred_check
          %p308 = pneg %p152
        $region62: #{tpu_custom_call.1} parent=47 // pred_check_branch
          %310 = sbr.rel (%p308) target = $region64
        $region63: #{tpu_custom_call.1} parent=47 // pred_region
          %311 = dma.done [#allocation9], 1024
        $region64: #{tpu_custom_call.1} parent=47 // pred_fallthru
          _
        %s312 = sand.u32 %s34, 1
        %s313 = scalar_lea.sflag [#allocation3], %s312
        %s314 = sand.u32 %s34, 1
        %s315 = smul.addr %s314, 4
        %s316 = scalar_lea.vmem [#allocation2], %s315
        %p317 = pneg %p47
        %p318 = pneg %p44
        %p319 = pneg %p68
        %p320 = pneg %p65
        %p321 = pneg %p89
        %p322 = pneg %p86
        %p323 = pneg %p110
        %p324 = pneg %p107
        %p325 = pneg %p131
        %p326 = pneg %p128
        %p327 = pneg %p152
        %p328 = pneg %p149
        %p329 = pneg %p173
        %p330 = pneg %p170
        %p331 = pneg %p199
        %p332 = pneg %p196
        %s333 = sand.u32 %s186, 1
        %s334 = scalar_lea.sflag [#allocation4], %s333
        %s335 = sand.u32 %s186, 1
        %s336 = smul.addr %s335, 8
        %s337 = scalar_lea.vmem [#allocation10], %s336
        %v339 = vld [vmem:[%s295] sm:$0xf]
        %v340 = vld [vmem:[#allocation5] sm:$0xf]
        %v341 = vld [vmem:[#allocation5 + $0x4] sm:$0xf]
        %v342 = vld [vmem:[#allocation5 + $0x8] sm:$0xf]
        %v343 = vld [vmem:[#allocation5 + $0xc] sm:$0xf]
        %v344 = vld [vmem:[%s2] sm:$0x1]
        %v346 = vlaneseq
        %v347 = vshrl.u32 %v346, 7
        %v348 = vsub.s32 0, %v347
        %v349 = vrot.slane %v344, %v348
        %v355 = vunpack.c.l.b16 %v340
        %v356 = vunpack.c.l.b16 %v341
        %v357 = vunpack.c.l.b16 %v342
        %v358 = vunpack.c.l.b16 %v343
        %v359 = vpack.c.b16 %v356, %v355
        %v360 = vpack.c.b16 %v358, %v357
        %vm363 = vcmask 261120
        %v365 = vsel %vm363, %v339, 0
        %367 = vmatprep.subr.bf16.mxu0 0
        %368 = vmatpush1.bf16.msra.mxu0 %v359
        %369 = vmatprep.subr.bf16.mxu0 0
        %370 = vmatpush1.bf16.msra.mxu0 %v360
        %371 = vmatprep.subr.bf16.mxu0 0
        %372 = vmatpush1.bf16.msra.mxu0 0
        %373 = vmatprep.subr.bf16.mxu0 0
        %374 = vmatpush1.bf16.msra.mxu0 0
        %375 = vmatprep.subr.bf16.mxu0 0
        %376 = vmatpush1.bf16.msra.mxu0 0
        %377 = vmatprep.subr.bf16.mxu0 0
        %378 = vmatpush1.bf16.msra.mxu0 0
        %379 = vmatprep.subr.bf16.mxu0 0
        %380 = vmatpush1.bf16.msra.mxu0 0
        %381 = vmatprep.subr.bf16.mxu0 0
        %382 = vmatpush1.bf16.msra.mxu0 0
        %383 = vmatprep.subr.bf16.mxu0 0
        %384 = vmatpush1.bf16.msra.mxu0 0
        %385 = vmatprep.subr.bf16.mxu0 0
        %386 = vmatpush1.bf16.msra.mxu0 0
        %387 = vmatprep.subr.bf16.mxu0 0
        %388 = vmatpush1.bf16.msra.mxu0 0
        %389 = vmatprep.subr.bf16.mxu0 0
        %390 = vmatpush1.bf16.msra.mxu0 0
        %391 = vmatprep.subr.bf16.mxu0 0
        %392 = vmatpush1.bf16.msra.mxu0 0
        %393 = vmatprep.subr.bf16.mxu0 0
        %394 = vmatpush1.bf16.msra.mxu0 0
        %395 = vmatprep.subr.bf16.mxu0 0
        %396 = vmatpush1.bf16.msra.mxu0 0
        %397 = vmatprep.subr.bf16.mxu0 0
        %398 = vmatpush1.bf16.msra.mxu0 0
        %399 = vmatprep.mubr.bf16.mxu0 0
        %400 = vmatmul.mubr.bf16.gmra.mrb[0].mxu0 %v365
        %v401 = vpop.f32.mrb[0].mxu0
        %v402 = vadd.f32 %v349, %v401
        %v403 = vpop.f32.mrb[0].mxu0
        %v404 = vpop.f32.mrb[0].mxu0
        %v405 = vpop.f32.mrb[0].mxu0
        %406 = vdwg.mxu0
        %v407 = vmax.f32 %v402, 0.0
        %v408 = vpack.c.bf16 %v407, %v407
        %v409 = vld [vmem:[#allocation7] sm:$0xf]
        %v410 = vld [vmem:[#allocation7 + $0x4] sm:$0xf]
        %v411 = vld [vmem:[#allocation7 + $0x8] sm:$0xf]
        %v412 = vld [vmem:[#allocation7 + $0xc] sm:$0xf]
        %v413 = vld [vmem:[#allocation7 + $0x10] sm:$0xf]
        %v414 = vld [vmem:[#allocation7 + $0x14] sm:$0xf]
        %v415 = vld [vmem:[#allocation7 + $0x18] sm:$0xf]
        %v416 = vld [vmem:[#allocation7 + $0x1c] sm:$0xf]
        %v417 = vld [vmem:[#allocation7 + $0x20] sm:$0xf]
        %v418 = vld [vmem:[#allocation7 + $0x24] sm:$0xf]
        %v419 = vld [vmem:[#allocation7 + $0x28] sm:$0xf]
        %v420 = vld [vmem:[#allocation7 + $0x2c] sm:$0xf]
        %v421 = vld [vmem:[#allocation7 + $0x30] sm:$0xf]
        %v422 = vld [vmem:[#allocation7 + $0x34] sm:$0xf]
        %v423 = vld [vmem:[#allocation7 + $0x38] sm:$0xf]
        %v424 = vld [vmem:[#allocation7 + $0x3c] sm:$0xf]
        %v425 = vld [vmem:[%s4] sm:$0x1]
        %v427 = vlaneseq
        %v428 = vshrl.u32 %v427, 7
        %v429 = vsub.s32 0, %v428
        %v430 = vrot.slane %v425, %v429
        %v448 = vunpack.c.l.b16 %v409
        %v449 = vunpack.c.l.b16 %v410
        %v450 = vunpack.c.l.b16 %v411
        %v451 = vunpack.c.l.b16 %v412
        %v452 = vunpack.c.l.b16 %v413
        %v453 = vunpack.c.l.b16 %v414
        %v454 = vunpack.c.l.b16 %v415
        %v455 = vunpack.c.l.b16 %v416
        %v456 = vunpack.c.l.b16 %v417
        %v457 = vunpack.c.l.b16 %v418
        %v458 = vunpack.c.l.b16 %v419
        %v459 = vunpack.c.l.b16 %v420
        %v460 = vunpack.c.l.b16 %v421
        %v461 = vunpack.c.l.b16 %v422
        %v462 = vunpack.c.l.b16 %v423
        %v463 = vunpack.c.l.b16 %v424
        %v464 = vpack.c.b16 %v449, %v448
        %v465 = vpack.c.b16 %v451, %v450
        %v466 = vpack.c.b16 %v453, %v452
        %v467 = vpack.c.b16 %v455, %v454
        %v468 = vpack.c.b16 %v457, %v456
        %v469 = vpack.c.b16 %v459, %v458
        %v470 = vpack.c.b16 %v461, %v460
        %v471 = vpack.c.b16 %v463, %v462
        %480 = vmatprep.subr.bf16.mxu0 0
        %481 = vmatpush1.bf16.msra.mxu0 %v464
        %482 = vmatprep.subr.bf16.mxu0 0
        %483 = vmatpush1.bf16.msra.mxu0 %v465
        %484 = vmatprep.subr.bf16.mxu0 0
        %485 = vmatpush1.bf16.msra.mxu0 %v466
        %486 = vmatprep.subr.bf16.mxu0 0
        %487 = vmatpush1.bf16.msra.mxu0 %v467
        %488 = vmatprep.subr.bf16.mxu0 0
        %489 = vmatpush1.bf16.msra.mxu0 %v468
        %490 = vmatprep.subr.bf16.mxu0 0
        %491 = vmatpush1.bf16.msra.mxu0 %v469
        %492 = vmatprep.subr.bf16.mxu0 0
        %493 = vmatpush1.bf16.msra.mxu0 %v470
        %494 = vmatprep.subr.bf16.mxu0 0
        %495 = vmatpush1.bf16.msra.mxu0 %v471
        %496 = vmatprep.subr.bf16.mxu0 0
        %497 = vmatpush1.bf16.msra.mxu0 0
        %498 = vmatprep.subr.bf16.mxu0 0
        %499 = vmatpush1.bf16.msra.mxu0 0
        %500 = vmatprep.subr.bf16.mxu0 0
        %501 = vmatpush1.bf16.msra.mxu0 0
        %502 = vmatprep.subr.bf16.mxu0 0
        %503 = vmatpush1.bf16.msra.mxu0 0
        %504 = vmatprep.subr.bf16.mxu0 0
        %505 = vmatpush1.bf16.msra.mxu0 0
        %506 = vmatprep.subr.bf16.mxu0 0
        %507 = vmatpush1.bf16.msra.mxu0 0
        %508 = vmatprep.subr.bf16.mxu0 0
        %509 = vmatpush1.bf16.msra.mxu0 0
        %510 = vmatprep.subr.bf16.mxu0 0
        %511 = vmatpush1.bf16.msra.mxu0 0
        %512 = vmatprep.mubr.bf16.mxu0 0
        %513 = vmatmul.mubr.bf16.gmra.mrb[0].mxu0 %v408
        %v514 = vpop.f32.mrb[0].mxu0
        %v515 = vadd.f32 %v430, %v514
        %v516 = vpop.f32.mrb[0].mxu0
        %v517 = vpop.f32.mrb[0].mxu0
        %v518 = vpop.f32.mrb[0].mxu0
        %519 = vdwg.mxu0
        %v520 = vmax.f32 %v515, 0.0
        %v521 = vpack.c.bf16 %v520, %v520
        %v522 = vld [vmem:[#allocation8] sm:$0xf]
        %v523 = vld [vmem:[#allocation8 + $0x4] sm:$0xf]
        %v524 = vld [vmem:[#allocation8 + $0x8] sm:$0xf]
        %v525 = vld [vmem:[#allocation8 + $0xc] sm:$0xf]
        %v526 = vld [vmem:[#allocation8 + $0x10] sm:$0xf]
        %v527 = vld [vmem:[#allocation8 + $0x14] sm:$0xf]
        %v528 = vld [vmem:[#allocation8 + $0x18] sm:$0xf]
        %v529 = vld [vmem:[#allocation8 + $0x1c] sm:$0xf]
        %v530 = vld [vmem:[#allocation8 + $0x20] sm:$0xf]
        %v531 = vld [vmem:[#allocation8 + $0x24] sm:$0xf]
        %v532 = vld [vmem:[#allocation8 + $0x28] sm:$0xf]
        %v533 = vld [vmem:[#allocation8 + $0x2c] sm:$0xf]
        %v534 = vld [vmem:[#allocation8 + $0x30] sm:$0xf]
        %v535 = vld [vmem:[#allocation8 + $0x34] sm:$0xf]
        %v536 = vld [vmem:[#allocation8 + $0x38] sm:$0xf]
        %v537 = vld [vmem:[#allocation8 + $0x3c] sm:$0xf]
        %v538 = vld [vmem:[%s6] sm:$0x1]
        %v540 = vlaneseq
        %v541 = vshrl.u32 %v540, 7
        %v542 = vsub.s32 0, %v541
        %v543 = vrot.slane %v538, %v542
        %v561 = vunpack.c.l.b16 %v522
        %v562 = vunpack.c.l.b16 %v523
        %v563 = vunpack.c.l.b16 %v524
        %v564 = vunpack.c.l.b16 %v525
        %v565 = vunpack.c.l.b16 %v526
        %v566 = vunpack.c.l.b16 %v527
        %v567 = vunpack.c.l.b16 %v528
        %v568 = vunpack.c.l.b16 %v529
        %v569 = vunpack.c.l.b16 %v530
        %v570 = vunpack.c.l.b16 %v531
        %v571 = vunpack.c.l.b16 %v532
        %v572 = vunpack.c.l.b16 %v533
        %v573 = vunpack.c.l.b16 %v534
        %v574 = vunpack.c.l.b16 %v535
        %v575 = vunpack.c.l.b16 %v536
        %v576 = vunpack.c.l.b16 %v537
        %v577 = vpack.c.b16 %v562, %v561
        %v578 = vpack.c.b16 %v564, %v563
        %v579 = vpack.c.b16 %v566, %v565
        %v580 = vpack.c.b16 %v568, %v567
        %v581 = vpack.c.b16 %v570, %v569
        %v582 = vpack.c.b16 %v572, %v571
        %v583 = vpack.c.b16 %v574, %v573
        %v584 = vpack.c.b16 %v576, %v575
        %593 = vmatprep.subr.bf16.mxu0 0
        %594 = vmatpush1.bf16.msra.mxu0 %v577
        %595 = vmatprep.subr.bf16.mxu0 0
        %596 = vmatpush1.bf16.msra.mxu0 %v578
        %597 = vmatprep.subr.bf16.mxu0 0
        %598 = vmatpush1.bf16.msra.mxu0 %v579
        %599 = vmatprep.subr.bf16.mxu0 0
        %600 = vmatpush1.bf16.msra.mxu0 %v580
        %601 = vmatprep.subr.bf16.mxu0 0
        %602 = vmatpush1.bf16.msra.mxu0 %v581
        %603 = vmatprep.subr.bf16.mxu0 0
        %604 = vmatpush1.bf16.msra.mxu0 %v582
        %605 = vmatprep.subr.bf16.mxu0 0
        %606 = vmatpush1.bf16.msra.mxu0 %v583
        %607 = vmatprep.subr.bf16.mxu0 0
        %608 = vmatpush1.bf16.msra.mxu0 %v584
        %609 = vmatprep.subr.bf16.mxu0 0
        %610 = vmatpush1.bf16.msra.mxu0 0
        %611 = vmatprep.subr.bf16.mxu0 0
        %612 = vmatpush1.bf16.msra.mxu0 0
        %613 = vmatprep.subr.bf16.mxu0 0
        %614 = vmatpush1.bf16.msra.mxu0 0
        %615 = vmatprep.subr.bf16.mxu0 0
        %616 = vmatpush1.bf16.msra.mxu0 0
        %617 = vmatprep.subr.bf16.mxu0 0
        %618 = vmatpush1.bf16.msra.mxu0 0
        %619 = vmatprep.subr.bf16.mxu0 0
        %620 = vmatpush1.bf16.msra.mxu0 0
        %621 = vmatprep.subr.bf16.mxu0 0
        %622 = vmatpush1.bf16.msra.mxu0 0
        %623 = vmatprep.subr.bf16.mxu0 0
        %624 = vmatpush1.bf16.msra.mxu0 0
        %625 = vmatprep.mubr.bf16.mxu0 0
        %626 = vmatmul.mubr.bf16.gmra.mrb[0].mxu0 %v521
        %v627 = vpop.f32.mrb[0].mxu0
        %v628 = vadd.f32 %v543, %v627
        %v629 = vpop.f32.mrb[0].mxu0
        %v630 = vpop.f32.mrb[0].mxu0
        %v631 = vpop.f32.mrb[0].mxu0
        %632 = vdwg.mxu0
        %633 = vst [vmem:[%s337] sm:$0xff] %v628
        %s634 = sand.u32 %s186, 1
        %s635 = scalar_lea.sflag [#allocation4], %s634
        %s636 = sand.u32 %s186, 1
        %s637 = smul.addr %s636, 8
        %s638 = scalar_lea.vmem [#allocation10], %s637
        // Predicated region
        $region65: #{tpu_custom_call.1} parent=47 // pred_check
          %p639 = pneg %p196
        $region66: #{tpu_custom_call.1} parent=47 // pred_check_branch
          %641 = sbr.rel (%p639) target = $region68
        $region67: #{tpu_custom_call.1} parent=47 // pred_region
          %s643 = ssub.s32 128, 128
          %644 = vsyncadd %s635, %s643
          %s645 = smul.addr %s26, 128
          %s646 = scalar_lea.hbm %s7, %s645
          %s648 = sshll.u32 %s638, 4
          %s649 = int_to_ptr.vmem [resolvable:$true] %s648
          %651 = dma.vmem_to_hbm [thread:$0]  %s649, 128, %s646, %s635
        $region68: #{tpu_custom_call.1} parent=47 // pred_fallthru
          _
      $region48: #{tpu_custom_call.1} parent=5 // pred_fallthru
        _
      %p652 = scmp.le.s32.totalorder 2, %s21
      // Predicated region
      $region69: #{tpu_custom_call.1} parent=5 // pred_check
        %p653 = pneg %p652
      $region70: #{tpu_custom_call.1} parent=5 // pred_check_branch
        %655 = sbr.rel (%p653) target = $region72
      $region71: #{tpu_custom_call.1} parent=5 // pred_region
        %s656 = ssub.s32 %s21, 2
        // Predicated region
        $region73: #{tpu_custom_call.1} parent=71 // pred_check
          %p657 = pneg %p202
        $region74: #{tpu_custom_call.1} parent=71 // pred_check_branch
          %659 = sbr.rel (%p657) target = $region76
        $region75: #{tpu_custom_call.1} parent=71 // pred_region
          %s660 = sand.u32 %s187, 1
          %s661 = scalar_lea.sflag [#allocation4], %s660
          %s662 = sand.u32 %s187, 1
          %s663 = smul.addr %s662, 8
          %s664 = scalar_lea.vmem [#allocation10], %s663
          %665 = dma.done %s661, 128
        $region76: #{tpu_custom_call.1} parent=71 // pred_fallthru
          _
      $region72: #{tpu_custom_call.1} parent=5 // pred_fallthru
        _
    $region6: #{tpu_custom_call.1} parent=1 // loop_footer
      %s25 = sadd.s32 1, %s21
    $region7: #{tpu_custom_call.1} parent=1 // loop_footer_branch
      %20 = sbr.rel target = $region3
    $region8: #{tpu_custom_call.1} parent=1 // loop_exit
      _
    %666 = vsyncpa [#allocation3], 1
    %s667 = scalar_lea.sflag [#allocation3], 1
    %668 = vsyncpa %s667, 1
    %669 = vsyncpa [#allocation6], 1
    %670 = vsyncpa [#allocation9], 1
    %671 = vsyncpa [#allocation4], 1
    %s672 = scalar_lea.sflag [#allocation4], 1
    %673 = vsyncpa %s672, 1

</llo_original>
